<compile_context>
chip_gen: v6e
topology: v6e:2x2x1
jax: 0.10.0
libtpu: 0.0.40
codegen_flags: <defaults>
</compile_context>

<pallas_src>
import jax
import jax.numpy as jnp
import numpy as np
from jax.experimental import pallas as pl
from jax.experimental.pallas import tpu as pltpu


def make_kernel(NB, HW, Cout):
    def kernel(xc_ref, w1_ref, b1_ref, w2_ref, b2_ref, wl_ref, bl_ref, out_ref):
        K1 = xc_ref.shape[-1]

        # ---- conv1 (3x3, pad 1): ONE (HW*NB, K1) @ (K1, Cout) MXU matmul.
        # (HW, NB, K1) -> (HW*NB, K1) is a layout-trivial leading-dim merge.
        xflat = xc_ref[...].reshape(HW * NB, K1)
        h1 = jnp.dot(xflat, w1_ref[...], preferred_element_type=jnp.float32)
        h1 = h1 + b1_ref[...]                       # bias broadcast (1, Cout)
        h1 = jnp.where(h1 >= 0, h1, 0.01 * h1)      # LeakyReLU(0.01), f32
        h1m = h1.astype(w2_ref.dtype)               # single cast for the conv2 operands

        # ---- conv2 (kernel == spatial extent, pad 0 -> 1x1 output): static sum over
        # pixels p of (NB, Cout) @ (Cout, Cout) MXU matmuls, accumulated in f32.
        # No relayout scratch / VMEM round-trip; at NB >= 64 every per-p matmul is a
        # real MXU tile.  Rows of h1m are ordered (p, n), so slice p*NB:(p+1)*NB.
        acc = jnp.dot(h1m[0:NB, :], w2_ref[0:Cout, :],
                      preferred_element_type=jnp.float32)
        for p in range(1, HW):
            acc = acc + jnp.dot(h1m[p * NB:(p + 1) * NB, :],
                                w2_ref[p * Cout:(p + 1) * Cout, :],
                                preferred_element_type=jnp.float32)
        acc = acc + b2_ref[...]
        acc = jnp.where(acc >= 0, acc, 0.01 * acc)  # (NB, Cout), LeakyReLU(0.01)

        # ---- flatten of (NB, Cout, 1, 1) is identity; final EqualizedLinear (out_dim=1)
        # as VPU multiply + lane reduction (a 1-lane-wide MXU matmul would be wasteful).
        out = jnp.sum(acc * wl_ref[...], axis=-1, keepdims=True) + bl_ref[...]
        # TODO(synk): lane-dense (1, NB) output blocks would need an in-kernel
        # (NB,1)->(1,NB) relayout; kept (NB,1) -- writeback is NB-times rarer now.
        out_ref[...] = out.astype(out_ref.dtype)

    return kernel


def _pick_chunk(N, nb_max):
    """Largest sensible sublane-aligned batch chunk (multiple of 8, <= nb_max).

    For small batches, shrink the chunk so N isn't padded up to a full nb_max and the
    'parallel' grid axis keeps >= 2 steps when possible (v7x megacore)."""
    n8 = ((N + 7) // 8) * 8
    if n8 >= 2 * nb_max:
        return nb_max
    if n8 < 16:
        return 8
    return max(8, min(nb_max, ((n8 // 2 + 7) // 8) * 8))


def final_disc_block(x, W1, b1, W2, b2, Wl, bl, *, nb=64, operand_dtype=jnp.bfloat16):
    """x: (N, Cin, H, W) NCHW.  W1: (Cout, Cin, 3, 3), W2: (Cout, Cout, k, k),
    Wl: (1, w_dim).  Returns (N, 1) float32."""
    N, Cin, H, W = x.shape
    Cout = W1.shape[0]
    k2 = W2.shape[2]
    assert H == k2 and W == k2, "final block expects conv2 kernel == spatial extent"
    HW = H * W
    w_dim = Wl.shape[1]
    assert w_dim == Cout, "flatten of (N, Cout, 1, 1) must equal w_dim"

    scale1 = float((2.0 / (Cin * 9)) ** 0.5)
    scale2 = float((2.0 / (Cout * k2 * k2)) ** 0.5)
    scale_lin = float((2.0 / w_dim) ** 0.5)

    # ---- batch chunking (sublane-aligned, "parallel" grid axis)
    NB = _pick_chunk(N, int(nb))
    N_pad = ((N + NB - 1) // NB) * NB
    if N_pad != N:
        x = jnp.pad(x, ((0, N_pad - N), (0, 0), (0, 0), (0, 0)))

    # ---- conv1 reduction dim padded to a multiple of 128 (lane-dense MXU operands)
    K1_raw = 9 * Cin
    K1 = ((K1_raw + 127) // 128) * 128

    # ---- glue: im2col for conv1 (3x3, pad 1); dims (p, n, (ki,kj,c))
    xp = jnp.pad(x, ((0, 0), (0, 0), (1, 1), (1, 1)))
    pat = jnp.stack([xp[:, :, ki:ki + H, kj:kj + W]
                     for ki in range(3) for kj in range(3)], axis=0)      # (9, N_pad, Cin, H, W)
    x_cols = pat.transpose(3, 4, 1, 0, 2).reshape(HW, N_pad, K1_raw)      # (HW, N_pad, 9*Cin)
    if K1 != K1_raw:
        x_cols = jnp.pad(x_cols, ((0, 0), (0, 0), (0, K1 - K1_raw)))
    x_cols = x_cols.astype(operand_dtype)

    # ---- glue: fold equalized-LR scales into the weights (no in-kernel scaling)
    w1m = W1.transpose(2, 3, 1, 0).reshape(K1_raw, Cout) * scale1          # rows (ki,kj,c)
    if K1 != K1_raw:
        w1m = jnp.pad(w1m, ((0, K1 - K1_raw), (0, 0)))
    w1m = w1m.astype(operand_dtype)
    w2m = (W2.transpose(2, 3, 1, 0).reshape(HW * Cout, Cout) * scale2).astype(operand_dtype)
    wlm = (Wl.astype(jnp.float32) * scale_lin).reshape(1, w_dim)
    b1m = b1.reshape(1, Cout).astype(jnp.float32)
    b2m = b2.reshape(1, Cout).astype(jnp.float32)
    blm = bl.reshape(1, 1).astype(jnp.float32)

    kernel = make_kernel(NB, HW, Cout)
    grid = (N_pad // NB,)

    # ---- VMEM budget: double-buffered x chunk + single-buffered weights + live values
    dsz = jnp.dtype(operand_dtype).itemsize
    x_blk = HW * NB * K1 * dsz
    w_res = (K1 * Cout + HW * Cout * Cout) * dsz
    vals = HW * NB * Cout * (4 + dsz) + NB * Cout * 4          # h1 f32 + operand copy + acc
    vmem_limit = int(min(max(2 * x_blk + w_res + vals + (6 << 20), 24 << 20), 100 << 20))

    # ---- advisory cost estimate (helps XLA schedule the im2col glue around the call)
    flops = 2 * N_pad * HW * Cout * (K1_raw + Cout) + 2 * N_pad * Cout
    bytes_accessed = (HW * N_pad * K1 * dsz + w_res
                      + (2 * Cout + w_dim + 1) * 4 + N_pad * 4)
    cost = pl.CostEstimate(flops=int(flops), transcendentals=0,
                           bytes_accessed=int(bytes_accessed))

    out = pl.pallas_call(
        kernel,
        out_shape=jax.ShapeDtypeStruct((N_pad, 1), jnp.float32),
        grid=grid,
        in_specs=[
            pl.BlockSpec((HW, NB, K1), lambda b: (0, b, 0)),          # batch chunk of im2col
            pl.BlockSpec((K1, Cout), lambda b: (0, 0),                # conv1 weight (resident,
                         pipeline_mode=pl.Buffered(1)),               #   single-buffered)
            pl.BlockSpec((1, Cout), lambda b: (0, 0)),                # conv1 bias
            pl.BlockSpec((HW * Cout, Cout), lambda b: (0, 0),         # conv2 weight (resident,
                         pipeline_mode=pl.Buffered(1)),               #   single-buffered)
            pl.BlockSpec((1, Cout), lambda b: (0, 0)),                # conv2 bias
            pl.BlockSpec((1, w_dim), lambda b: (0, 0)),               # final linear weight
            pl.BlockSpec((1, 1), lambda b: (0, 0)),                   # final linear bias
        ],
        out_specs=pl.BlockSpec((NB, 1), lambda b: (b, 0)),
        compiler_params=pltpu.CompilerParams(
            dimension_semantics=("parallel",),
            vmem_limit_bytes=vmem_limit),
        cost_estimate=cost,
    )(x_cols, w1m, b1m, w2m, b2m, wlm, blm)

    return out[:N]


def reference(x, W1, b1, W2, b2, Wl, bl):
    """Pure-JAX reference matching the PyTorch forward exactly."""
    N, Cin, H, W = x.shape
    k2 = W2.shape[2]
    scale1 = (2.0 / (Cin * 9)) ** 0.5
    scale2 = (2.0 / (W1.shape[0] * k2 * k2)) ** 0.5
    scale_lin = (2.0 / Wl.shape[1]) ** 0.5
    dn = ('NCHW', 'OIHW', 'NCHW')
    h = jax.lax.conv_general_dilated(x * scale1, W1, (1, 1), ((1, 1), (1, 1)),
                                     dimension_numbers=dn) + b1.reshape(1, -1, 1, 1)
    h = jnp.where(h >= 0, h, 0.01 * h)
    h = jax.lax.conv_general_dilated(h * scale2, W2, (1, 1), ((0, 0), (0, 0)),
                                     dimension_numbers=dn) + b2.reshape(1, -1, 1, 1)
    h = jnp.where(h >= 0, h, 0.01 * h)
    h = h.reshape(N, -1)
    return (h * scale_lin) @ Wl.T + bl


if __name__ == "__main__":
    # Small shapes consistent with the module: conv2 kernel 4, pad 0 on a 4x4 input
    # -> 1x1 spatial, so w_dim == output channels.
    N, Cin, Cout, H = 2, 4, 8, 4
    w_dim = Cout

    key = jax.random.PRNGKey(0)
    k0, k1, k2, k3 = jax.random.split(key, 4)
    x = jax.random.normal(k0, (N, Cin, H, H), jnp.float32)
    # PyTorch init: weights ~ N(0, 1), biases zero.
    W1 = jax.random.normal(k1, (Cout, Cin, 3, 3), jnp.float32)
    W2 = jax.random.normal(k2, (Cout, Cout, 4, 4), jnp.float32)
    Wl = jax.random.normal(k3, (1, w_dim), jnp.float32)
    b1 = jnp.zeros((Cout,), jnp.float32)
    b2 = jnp.zeros((Cout,), jnp.float32)
    bl = jnp.zeros((1,), jnp.float32)

    ref = jax.block_until_ready(reference(x, W1, b1, W2, b2, Wl, bl))

    # f32 matmul operands -> tight tolerance
    out = jax.block_until_ready(
        final_disc_block(x, W1, b1, W2, b2, Wl, bl, operand_dtype=jnp.float32))
    np.testing.assert_allclose(np.asarray(out), np.asarray(ref), rtol=1e-4, atol=1e-4)

    # multi-chunk grid (parallel batch axis + batch padding/slicing path), f32 operands
    xb = jax.random.normal(k0, (18, Cin, H, H), jnp.float32)
    refb = jax.block_until_ready(reference(xb, W1, b1, W2, b2, Wl, bl))
    outb = jax.block_until_ready(
        final_disc_block(xb, W1, b1, W2, b2, Wl, bl, operand_dtype=jnp.float32))
    np.testing.assert_allclose(np.asarray(outb), np.asarray(refb), rtol=1e-4, atol=1e-4)

    # default bf16 matmul-operand path (halved DMA/VMEM; f32 accumulation) -- loose tolerance
    out16 = jax.block_until_ready(final_disc_block(x, W1, b1, W2, b2, Wl, bl))
    np.testing.assert_allclose(np.asarray(out16), np.asarray(ref), rtol=1e-1, atol=1.5e-1)

    print("KERNEL_OK")
</pallas_src>

<mosaic_0001>
module attributes {stable_mosaic.version = 11 : i64} {
  func.func @kernel(%arg0: i32, %arg1: memref<16x8x128xf32, #tpu.memory_space<vmem>>, %arg2: memref<128x8xf32, #tpu.memory_space<vmem>>, %arg3: memref<1x8xf32, #tpu.memory_space<vmem>>, %arg4: memref<128x8xf32, #tpu.memory_space<vmem>>, %arg5: memref<1x8xf32, #tpu.memory_space<vmem>>, %arg6: memref<1x8xf32, #tpu.memory_space<vmem>>, %arg7: memref<1x1xf32, #tpu.memory_space<vmem>>, %arg8: memref<8x1xf32, #tpu.memory_space<vmem>>) attributes {dimension_semantics = [#tpu.dimension_semantics<parallel>], iteration_bounds = array<i64: 1>, scalar_prefetch = 0 : i64, scratch_operands = 0 : i64, tpu.core_type = #tpu.core_type<tc>, window_params = [{transform_indices = @transform_0, window_bounds = array<i64: 16, 8, 128>}, {pipeline_mode = #tpu.pipeline_mode<synchronous>, transform_indices = @transform_1, window_bounds = array<i64: 128, 8>}, {pipeline_mode = #tpu.pipeline_mode<synchronous>, transform_indices = @transform_2, window_bounds = array<i64: 1, 8>}, {pipeline_mode = #tpu.pipeline_mode<synchronous>, transform_indices = @transform_3, window_bounds = array<i64: 128, 8>}, {pipeline_mode = #tpu.pipeline_mode<synchronous>, transform_indices = @transform_4, window_bounds = array<i64: 1, 8>}, {pipeline_mode = #tpu.pipeline_mode<synchronous>, transform_indices = @transform_5, window_bounds = array<i64: 1, 8>}, {pipeline_mode = #tpu.pipeline_mode<synchronous>, transform_indices = @transform_6, window_bounds = array<i64: 1, 1>}, {transform_indices = @transform_7, window_bounds = array<i64: 8, 1>}]} {
    %c0 = arith.constant 0 : index
    %c0_0 = arith.constant 0 : index
    %c0_1 = arith.constant 0 : index
    %0 = vector.load %arg1[%c0, %c0_0, %c0_1] : memref<16x8x128xf32, #tpu.memory_space<vmem>>, vector<16x8x128xf32>
    %1 = vector.shape_cast %0 : vector<16x8x128xf32> to vector<128x128xf32>
    %c0_2 = arith.constant 0 : index
    %c0_3 = arith.constant 0 : index
    %2 = vector.load %arg2[%c0_2, %c0_3] : memref<128x8xf32, #tpu.memory_space<vmem>>, vector<128x8xf32>
    %cst = arith.constant dense<0.000000e+00> : vector<128x8xf32>
    %3 = tpu.matmul %1, %2, %cst {dimension_numbers = #tpu.dot_dimension_numbers<[1], [0], [0], [1], [0, 0, 1, 1], [], []>} : vector<128x128xf32>, vector<128x8xf32>, vector<128x8xf32> -> vector<128x8xf32>
    %c0_4 = arith.constant 0 : index
    %c0_5 = arith.constant 0 : index
    %4 = vector.load %arg3[%c0_4, %c0_5] : memref<1x8xf32, #tpu.memory_space<vmem>>, vector<1x8xf32>
    %5 = vector.broadcast %4 : vector<1x8xf32> to vector<128x8xf32>
    %6 = arith.addf %3, %5 : vector<128x8xf32>
    %cst_6 = arith.constant 0.000000e+00 : f32
    %7 = vector.broadcast %cst_6 : f32 to vector<128x8xf32>
    %8 = arith.cmpf oge, %6, %7 : vector<128x8xf32>
    %cst_7 = arith.constant 0.00999999977 : f32
    %9 = vector.broadcast %cst_7 : f32 to vector<128x8xf32>
    %10 = arith.mulf %9, %6 : vector<128x8xf32>
    %11 = arith.select %8, %6, %10 : vector<128x8xi1>, vector<128x8xf32>
    %12 = vector.extract_strided_slice %11 {offsets = [0, 0], sizes = [8, 8], strides = [1, 1]} : vector<128x8xf32> to vector<8x8xf32>
    %c0_8 = arith.constant 0 : index
    %c0_9 = arith.constant 0 : index
    %13 = vector.load %arg4[%c0_8, %c0_9] : memref<128x8xf32, #tpu.memory_space<vmem>>, vector<8x8xf32>
    %cst_10 = arith.constant dense<0.000000e+00> : vector<8x8xf32>
    %14 = tpu.matmul %12, %13, %cst_10 {dimension_numbers = #tpu.dot_dimension_numbers<[1], [0], [0], [1], [0, 0, 1, 1], [], []>} : vector<8x8xf32>, vector<8x8xf32>, vector<8x8xf32> -> vector<8x8xf32>
    %15 = vector.extract_strided_slice %11 {offsets = [8, 0], sizes = [8, 8], strides = [1, 1]} : vector<128x8xf32> to vector<8x8xf32>
    %c8 = arith.constant 8 : index
    %c0_11 = arith.constant 0 : index
    %16 = vector.load %arg4[%c8, %c0_11] : memref<128x8xf32, #tpu.memory_space<vmem>>, vector<8x8xf32>
    %cst_12 = arith.constant dense<0.000000e+00> : vector<8x8xf32>
    %17 = tpu.matmul %15, %16, %cst_12 {dimension_numbers = #tpu.dot_dimension_numbers<[1], [0], [0], [1], [0, 0, 1, 1], [], []>} : vector<8x8xf32>, vector<8x8xf32>, vector<8x8xf32> -> vector<8x8xf32>
    %18 = arith.addf %14, %17 : vector<8x8xf32>
    %19 = vector.extract_strided_slice %11 {offsets = [16, 0], sizes = [8, 8], strides = [1, 1]} : vector<128x8xf32> to vector<8x8xf32>
    %c16 = arith.constant 16 : index
    %c0_13 = arith.constant 0 : index
    %20 = vector.load %arg4[%c16, %c0_13] : memref<128x8xf32, #tpu.memory_space<vmem>>, vector<8x8xf32>
    %cst_14 = arith.constant dense<0.000000e+00> : vector<8x8xf32>
    %21 = tpu.matmul %19, %20, %cst_14 {dimension_numbers = #tpu.dot_dimension_numbers<[1], [0], [0], [1], [0, 0, 1, 1], [], []>} : vector<8x8xf32>, vector<8x8xf32>, vector<8x8xf32> -> vector<8x8xf32>
    %22 = arith.addf %18, %21 : vector<8x8xf32>
    %23 = vector.extract_strided_slice %11 {offsets = [24, 0], sizes = [8, 8], strides = [1, 1]} : vector<128x8xf32> to vector<8x8xf32>
    %c24 = arith.constant 24 : index
    %c0_15 = arith.constant 0 : index
    %24 = vector.load %arg4[%c24, %c0_15] : memref<128x8xf32, #tpu.memory_space<vmem>>, vector<8x8xf32>
    %cst_16 = arith.constant dense<0.000000e+00> : vector<8x8xf32>
    %25 = tpu.matmul %23, %24, %cst_16 {dimension_numbers = #tpu.dot_dimension_numbers<[1], [0], [0], [1], [0, 0, 1, 1], [], []>} : vector<8x8xf32>, vector<8x8xf32>, vector<8x8xf32> -> vector<8x8xf32>
    %26 = arith.addf %22, %25 : vector<8x8xf32>
    %27 = vector.extract_strided_slice %11 {offsets = [32, 0], sizes = [8, 8], strides = [1, 1]} : vector<128x8xf32> to vector<8x8xf32>
    %c32 = arith.constant 32 : index
    %c0_17 = arith.constant 0 : index
    %28 = vector.load %arg4[%c32, %c0_17] : memref<128x8xf32, #tpu.memory_space<vmem>>, vector<8x8xf32>
    %cst_18 = arith.constant dense<0.000000e+00> : vector<8x8xf32>
    %29 = tpu.matmul %27, %28, %cst_18 {dimension_numbers = #tpu.dot_dimension_numbers<[1], [0], [0], [1], [0, 0, 1, 1], [], []>} : vector<8x8xf32>, vector<8x8xf32>, vector<8x8xf32> -> vector<8x8xf32>
    %30 = arith.addf %26, %29 : vector<8x8xf32>
    %31 = vector.extract_strided_slice %11 {offsets = [40, 0], sizes = [8, 8], strides = [1, 1]} : vector<128x8xf32> to vector<8x8xf32>
    %c40 = arith.constant 40 : index
    %c0_19 = arith.constant 0 : index
    %32 = vector.load %arg4[%c40, %c0_19] : memref<128x8xf32, #tpu.memory_space<vmem>>, vector<8x8xf32>
    %cst_20 = arith.constant dense<0.000000e+00> : vector<8x8xf32>
    %33 = tpu.matmul %31, %32, %cst_20 {dimension_numbers = #tpu.dot_dimension_numbers<[1], [0], [0], [1], [0, 0, 1, 1], [], []>} : vector<8x8xf32>, vector<8x8xf32>, vector<8x8xf32> -> vector<8x8xf32>
    %34 = arith.addf %30, %33 : vector<8x8xf32>
    %35 = vector.extract_strided_slice %11 {offsets = [48, 0], sizes = [8, 8], strides = [1, 1]} : vector<128x8xf32> to vector<8x8xf32>
    %c48 = arith.constant 48 : index
    %c0_21 = arith.constant 0 : index
    %36 = vector.load %arg4[%c48, %c0_21] : memref<128x8xf32, #tpu.memory_space<vmem>>, vector<8x8xf32>
    %cst_22 = arith.constant dense<0.000000e+00> : vector<8x8xf32>
    %37 = tpu.matmul %35, %36, %cst_22 {dimension_numbers = #tpu.dot_dimension_numbers<[1], [0], [0], [1], [0, 0, 1, 1], [], []>} : vector<8x8xf32>, vector<8x8xf32>, vector<8x8xf32> -> vector<8x8xf32>
    %38 = arith.addf %34, %37 : vector<8x8xf32>
    %39 = vector.extract_strided_slice %11 {offsets = [56, 0], sizes = [8, 8], strides = [1, 1]} : vector<128x8xf32> to vector<8x8xf32>
    %c56 = arith.constant 56 : index
    %c0_23 = arith.constant 0 : index
    %40 = vector.load %arg4[%c56, %c0_23] : memref<128x8xf32, #tpu.memory_space<vmem>>, vector<8x8xf32>
    %cst_24 = arith.constant dense<0.000000e+00> : vector<8x8xf32>
    %41 = tpu.matmul %39, %40, %cst_24 {dimension_numbers = #tpu.dot_dimension_numbers<[1], [0], [0], [1], [0, 0, 1, 1], [], []>} : vector<8x8xf32>, vector<8x8xf32>, vector<8x8xf32> -> vector<8x8xf32>
    %42 = arith.addf %38, %41 : vector<8x8xf32>
    %43 = vector.extract_strided_slice %11 {offsets = [64, 0], sizes = [8, 8], strides = [1, 1]} : vector<128x8xf32> to vector<8x8xf32>
    %c64 = arith.constant 64 : index
    %c0_25 = arith.constant 0 : index
    %44 = vector.load %arg4[%c64, %c0_25] : memref<128x8xf32, #tpu.memory_space<vmem>>, vector<8x8xf32>
    %cst_26 = arith.constant dense<0.000000e+00> : vector<8x8xf32>
    %45 = tpu.matmul %43, %44, %cst_26 {dimension_numbers = #tpu.dot_dimension_numbers<[1], [0], [0], [1], [0, 0, 1, 1], [], []>} : vector<8x8xf32>, vector<8x8xf32>, vector<8x8xf32> -> vector<8x8xf32>
    %46 = arith.addf %42, %45 : vector<8x8xf32>
    %47 = vector.extract_strided_slice %11 {offsets = [72, 0], sizes = [8, 8], strides = [1, 1]} : vector<128x8xf32> to vector<8x8xf32>
    %c72 = arith.constant 72 : index
    %c0_27 = arith.constant 0 : index
    %48 = vector.load %arg4[%c72, %c0_27] : memref<128x8xf32, #tpu.memory_space<vmem>>, vector<8x8xf32>
    %cst_28 = arith.constant dense<0.000000e+00> : vector<8x8xf32>
    %49 = tpu.matmul %47, %48, %cst_28 {dimension_numbers = #tpu.dot_dimension_numbers<[1], [0], [0], [1], [0, 0, 1, 1], [], []>} : vector<8x8xf32>, vector<8x8xf32>, vector<8x8xf32> -> vector<8x8xf32>
    %50 = arith.addf %46, %49 : vector<8x8xf32>
    %51 = vector.extract_strided_slice %11 {offsets = [80, 0], sizes = [8, 8], strides = [1, 1]} : vector<128x8xf32> to vector<8x8xf32>
    %c80 = arith.constant 80 : index
    %c0_29 = arith.constant 0 : index
    %52 = vector.load %arg4[%c80, %c0_29] : memref<128x8xf32, #tpu.memory_space<vmem>>, vector<8x8xf32>
    %cst_30 = arith.constant dense<0.000000e+00> : vector<8x8xf32>
    %53 = tpu.matmul %51, %52, %cst_30 {dimension_numbers = #tpu.dot_dimension_numbers<[1], [0], [0], [1], [0, 0, 1, 1], [], []>} : vector<8x8xf32>, vector<8x8xf32>, vector<8x8xf32> -> vector<8x8xf32>
    %54 = arith.addf %50, %53 : vector<8x8xf32>
    %55 = vector.extract_strided_slice %11 {offsets = [88, 0], sizes = [8, 8], strides = [1, 1]} : vector<128x8xf32> to vector<8x8xf32>
    %c88 = arith.constant 88 : index
    %c0_31 = arith.constant 0 : index
    %56 = vector.load %arg4[%c88, %c0_31] : memref<128x8xf32, #tpu.memory_space<vmem>>, vector<8x8xf32>
    %cst_32 = arith.constant dense<0.000000e+00> : vector<8x8xf32>
    %57 = tpu.matmul %55, %56, %cst_32 {dimension_numbers = #tpu.dot_dimension_numbers<[1], [0], [0], [1], [0, 0, 1, 1], [], []>} : vector<8x8xf32>, vector<8x8xf32>, vector<8x8xf32> -> vector<8x8xf32>
    %58 = arith.addf %54, %57 : vector<8x8xf32>
    %59 = vector.extract_strided_slice %11 {offsets = [96, 0], sizes = [8, 8], strides = [1, 1]} : vector<128x8xf32> to vector<8x8xf32>
    %c96 = arith.constant 96 : index
    %c0_33 = arith.constant 0 : index
    %60 = vector.load %arg4[%c96, %c0_33] : memref<128x8xf32, #tpu.memory_space<vmem>>, vector<8x8xf32>
    %cst_34 = arith.constant dense<0.000000e+00> : vector<8x8xf32>
    %61 = tpu.matmul %59, %60, %cst_34 {dimension_numbers = #tpu.dot_dimension_numbers<[1], [0], [0], [1], [0, 0, 1, 1], [], []>} : vector<8x8xf32>, vector<8x8xf32>, vector<8x8xf32> -> vector<8x8xf32>
    %62 = arith.addf %58, %61 : vector<8x8xf32>
    %63 = vector.extract_strided_slice %11 {offsets = [104, 0], sizes = [8, 8], strides = [1, 1]} : vector<128x8xf32> to vector<8x8xf32>
    %c104 = arith.constant 104 : index
    %c0_35 = arith.constant 0 : index
    %64 = vector.load %arg4[%c104, %c0_35] : memref<128x8xf32, #tpu.memory_space<vmem>>, vector<8x8xf32>
    %cst_36 = arith.constant dense<0.000000e+00> : vector<8x8xf32>
    %65 = tpu.matmul %63, %64, %cst_36 {dimension_numbers = #tpu.dot_dimension_numbers<[1], [0], [0], [1], [0, 0, 1, 1], [], []>} : vector<8x8xf32>, vector<8x8xf32>, vector<8x8xf32> -> vector<8x8xf32>
    %66 = arith.addf %62, %65 : vector<8x8xf32>
    %67 = vector.extract_strided_slice %11 {offsets = [112, 0], sizes = [8, 8], strides = [1, 1]} : vector<128x8xf32> to vector<8x8xf32>
    %c112 = arith.constant 112 : index
    %c0_37 = arith.constant 0 : index
    %68 = vector.load %arg4[%c112, %c0_37] : memref<128x8xf32, #tpu.memory_space<vmem>>, vector<8x8xf32>
    %cst_38 = arith.constant dense<0.000000e+00> : vector<8x8xf32>
    %69 = tpu.matmul %67, %68, %cst_38 {dimension_numbers = #tpu.dot_dimension_numbers<[1], [0], [0], [1], [0, 0, 1, 1], [], []>} : vector<8x8xf32>, vector<8x8xf32>, vector<8x8xf32> -> vector<8x8xf32>
    %70 = arith.addf %66, %69 : vector<8x8xf32>
    %71 = vector.extract_strided_slice %11 {offsets = [120, 0], sizes = [8, 8], strides = [1, 1]} : vector<128x8xf32> to vector<8x8xf32>
    %c120 = arith.constant 120 : index
    %c0_39 = arith.constant 0 : index
    %72 = vector.load %arg4[%c120, %c0_39] : memref<128x8xf32, #tpu.memory_space<vmem>>, vector<8x8xf32>
    %cst_40 = arith.constant dense<0.000000e+00> : vector<8x8xf32>
    %73 = tpu.matmul %71, %72, %cst_40 {dimension_numbers = #tpu.dot_dimension_numbers<[1], [0], [0], [1], [0, 0, 1, 1], [], []>} : vector<8x8xf32>, vector<8x8xf32>, vector<8x8xf32> -> vector<8x8xf32>
    %74 = arith.addf %70, %73 : vector<8x8xf32>
    %c0_41 = arith.constant 0 : index
    %c0_42 = arith.constant 0 : index
    %75 = vector.load %arg5[%c0_41, %c0_42] : memref<1x8xf32, #tpu.memory_space<vmem>>, vector<1x8xf32>
    %76 = vector.broadcast %75 : vector<1x8xf32> to vector<8x8xf32>
    %77 = arith.addf %74, %76 : vector<8x8xf32>
    %cst_43 = arith.constant 0.000000e+00 : f32
    %78 = vector.broadcast %cst_43 : f32 to vector<8x8xf32>
    %79 = arith.cmpf oge, %77, %78 : vector<8x8xf32>
    %cst_44 = arith.constant 0.00999999977 : f32
    %80 = vector.broadcast %cst_44 : f32 to vector<8x8xf32>
    %81 = arith.mulf %80, %77 : vector<8x8xf32>
    %82 = arith.select %79, %77, %81 : vector<8x8xi1>, vector<8x8xf32>
    %c0_45 = arith.constant 0 : index
    %c0_46 = arith.constant 0 : index
    %83 = vector.load %arg6[%c0_45, %c0_46] : memref<1x8xf32, #tpu.memory_space<vmem>>, vector<1x8xf32>
    %84 = vector.broadcast %83 : vector<1x8xf32> to vector<8x8xf32>
    %85 = arith.mulf %82, %84 : vector<8x8xf32>
    %cst_47 = arith.constant dense<0.000000e+00> : vector<8xf32>
    %86 = vector.multi_reduction <add>, %85, %cst_47 [1] : vector<8x8xf32> to vector<8xf32>
    %87 = vector.shape_cast %86 : vector<8xf32> to vector<8x1xf32>
    %c0_48 = arith.constant 0 : index
    %c0_49 = arith.constant 0 : index
    %88 = vector.load %arg7[%c0_48, %c0_49] : memref<1x1xf32, #tpu.memory_space<vmem>>, vector<1x1xf32>
    %89 = vector.broadcast %88 : vector<1x1xf32> to vector<8x1xf32>
    %90 = arith.addf %87, %89 : vector<8x1xf32>
    %c0_50 = arith.constant 0 : index
    %c0_51 = arith.constant 0 : index
    %91 = vector.load %arg8[%c0_50, %c0_51] : memref<8x1xf32, #tpu.memory_space<vmem>>, vector<8x1xf32>
    tpu.vector_store %arg8[%c0_50, %c0_51], %90 {strides = array<i32>} : memref<8x1xf32, #tpu.memory_space<vmem>>, vector<8x1xf32>,
    return
  }
  func.func @transform_0(%arg0: i32) -> (i32, i32, i32) {
    %c0_i32 = arith.constant 0 : i32
    %c0_i32_0 = arith.constant 0 : i32
    %c0_i32_1 = arith.constant 0 : i32
    return %c0_i32, %arg0, %c0_i32_0 : i32, i32, i32
  }
  func.func @transform_1(%arg0: i32) -> (i32, i32) {
    %c0_i32 = arith.constant 0 : i32
    %c0_i32_0 = arith.constant 0 : i32
    %c0_i32_1 = arith.constant 0 : i32
    return %c0_i32, %c0_i32_0 : i32, i32
  }
  func.func @transform_2(%arg0: i32) -> (i32, i32) {
    %c0_i32 = arith.constant 0 : i32
    %c0_i32_0 = arith.constant 0 : i32
    %c0_i32_1 = arith.constant 0 : i32
    return %c0_i32, %c0_i32_0 : i32, i32
  }
  func.func @transform_3(%arg0: i32) -> (i32, i32) {
    %c0_i32 = arith.constant 0 : i32
    %c0_i32_0 = arith.constant 0 : i32
    %c0_i32_1 = arith.constant 0 : i32
    return %c0_i32, %c0_i32_0 : i32, i32
  }
  func.func @transform_4(%arg0: i32) -> (i32, i32) {
    %c0_i32 = arith.constant 0 : i32
    %c0_i32_0 = arith.constant 0 : i32
    %c0_i32_1 = arith.constant 0 : i32
    return %c0_i32, %c0_i32_0 : i32, i32
  }
  func.func @transform_5(%arg0: i32) -> (i32, i32) {
    %c0_i32 = arith.constant 0 : i32
    %c0_i32_0 = arith.constant 0 : i32
    %c0_i32_1 = arith.constant 0 : i32
    return %c0_i32, %c0_i32_0 : i32, i32
  }
  func.func @transform_6(%arg0: i32) -> (i32, i32) {
    %c0_i32 = arith.constant 0 : i32
    %c0_i32_0 = arith.constant 0 : i32
    %c0_i32_1 = arith.constant 0 : i32
    return %c0_i32, %c0_i32_0 : i32, i32
  }
  func.func @transform_7(%arg0: i32) -> (i32, i32) {
    %c0_i32 = arith.constant 0 : i32
    %c0_i32_0 = arith.constant 0 : i32
    return %arg0, %c0_i32 : i32, i32
  }
}

</mosaic_0001>

<llo_original>
// kernel: tpu_custom_call.1
$region0: #{tpu_custom_call.1}
  #allocation0 [shape = 'u32[]', space=smem, size = 0x4, offset = 0x4, fixed_abs, tag = 'smem constant byte address 0x4 - core index']
  #allocation1 [shape = 'u32[144,128]{1,0:T(1,128)}', space=vmem, size = 0x12000, scoped, tag = 'internal scratch']
  #allocation2 [shape = 'f32[1,1]{1,0:T(1,128)S(1)}', space=vmem, size = 0x200, scoped, tag = 'scoped memory for tpu_custom_call.1']
  %s0 = inlined_call_operand.vmem [shape: f32[16,8,128], index: 0, kind: input, shape index: {}]
  %s1 = inlined_call_operand.vmem [shape: f32[128,8], index: 1, kind: input, shape index: {}]
  %s2 = inlined_call_operand.vmem [shape: f32[1,8], index: 2, kind: input, shape index: {}]
  %s3 = inlined_call_operand.vmem [shape: f32[128,8], index: 3, kind: input, shape index: {}]
  %s4 = inlined_call_operand.vmem [shape: f32[1,8], index: 4, kind: input, shape index: {}]
  %s5 = inlined_call_operand.vmem [shape: f32[1,8], index: 5, kind: input, shape index: {}]
  %s6 = inlined_call_operand.<no memory space> [shape: f32[1,1], index: 6, kind: input, shape index: {}]
  %s7 = inlined_call_operand.vmem [shape: f32[8,1], index: 7, kind: output, shape index: {}]
  %s8 = sld [smem:[#allocation0]]
  $region38: #{tpu_custom_call.1} parent=0
    _
  %s10 = ssub.s32 1, %s8
  %s11 = scalar_select 0, %s10, %s8
  %v12 = vstv %s6
  %13 = vst [vmem:[#allocation2] sm:$0x1] %v12
  // Predicated region
  $region2: #{tpu_custom_call.1} parent=0 // pred_check
    _
  $region3: #{tpu_custom_call.1} parent=0 // pred_check_branch
    %15 = sbr.rel (0) target = $region5
  $region4: #{tpu_custom_call.1} parent=0 // pred_region
    _
  $region5: #{tpu_custom_call.1} parent=0 // pred_fallthru
    _
  // Predicated region
  $region6: #{tpu_custom_call.1} parent=0 // pred_check
    _
  $region7: #{tpu_custom_call.1} parent=0 // pred_check_branch
    %17 = sbr.rel (0) target = $region9
  $region8: #{tpu_custom_call.1} parent=0 // pred_region
    _
  $region9: #{tpu_custom_call.1} parent=0 // pred_fallthru
    _
  // Predicated region
  $region10: #{tpu_custom_call.1} parent=0 // pred_check
    _
  $region11: #{tpu_custom_call.1} parent=0 // pred_check_branch
    %19 = sbr.rel (0) target = $region13
  $region12: #{tpu_custom_call.1} parent=0 // pred_region
    _
  $region13: #{tpu_custom_call.1} parent=0 // pred_fallthru
    _
  // Predicated region
  $region14: #{tpu_custom_call.1} parent=0 // pred_check
    _
  $region15: #{tpu_custom_call.1} parent=0 // pred_check_branch
    %21 = sbr.rel (0) target = $region17
  $region16: #{tpu_custom_call.1} parent=0 // pred_region
    _
  $region17: #{tpu_custom_call.1} parent=0 // pred_fallthru
    _
  // Predicated region
  $region18: #{tpu_custom_call.1} parent=0 // pred_check
    _
  $region19: #{tpu_custom_call.1} parent=0 // pred_check_branch
    %23 = sbr.rel (0) target = $region21
  $region20: #{tpu_custom_call.1} parent=0 // pred_region
    _
  $region21: #{tpu_custom_call.1} parent=0 // pred_fallthru
    _
  // Predicated region
  $region22: #{tpu_custom_call.1} parent=0 // pred_check
    _
  $region23: #{tpu_custom_call.1} parent=0 // pred_check_branch
    %25 = sbr.rel (0) target = $region25
  $region24: #{tpu_custom_call.1} parent=0 // pred_region
    _
  $region25: #{tpu_custom_call.1} parent=0 // pred_fallthru
    _
  // Predicated region
  $region26: #{tpu_custom_call.1} parent=0 // pred_check
    _
  $region27: #{tpu_custom_call.1} parent=0 // pred_check_branch
    %27 = sbr.rel (0) target = $region29
  $region28: #{tpu_custom_call.1} parent=0 // pred_region
    _
  $region29: #{tpu_custom_call.1} parent=0 // pred_fallthru
    _
  %v28 = vld [vmem:[%s0] sm:$0xff]
  %v29 = vld [vmem:[%s0 + $0x8] sm:$0xff]
  %v30 = vld [vmem:[%s0 + $0x10] sm:$0xff]
  %v31 = vld [vmem:[%s0 + $0x18] sm:$0xff]
  %v32 = vld [vmem:[%s0 + $0x20] sm:$0xff]
  %v33 = vld [vmem:[%s0 + $0x28] sm:$0xff]
  %v34 = vld [vmem:[%s0 + $0x30] sm:$0xff]
  %v35 = vld [vmem:[%s0 + $0x38] sm:$0xff]
  %v36 = vld [vmem:[%s0 + $0x40] sm:$0xff]
  %v37 = vld [vmem:[%s0 + $0x48] sm:$0xff]
  %v38 = vld [vmem:[%s0 + $0x50] sm:$0xff]
  %v39 = vld [vmem:[%s0 + $0x58] sm:$0xff]
  %v40 = vld [vmem:[%s0 + $0x60] sm:$0xff]
  %v41 = vld [vmem:[%s0 + $0x68] sm:$0xff]
  %v42 = vld [vmem:[%s0 + $0x70] sm:$0xff]
  %v43 = vld [vmem:[%s0 + $0x78] sm:$0xff]
  %v44 = vld [vmem:[%s1] sm:$0xff]
  %v45 = vld [vmem:[%s1 + $0x8] sm:$0xff]
  %v46 = vld [vmem:[%s1 + $0x10] sm:$0xff]
  %v47 = vld [vmem:[%s1 + $0x18] sm:$0xff]
  %v48 = vld [vmem:[%s1 + $0x20] sm:$0xff]
  %v49 = vld [vmem:[%s1 + $0x28] sm:$0xff]
  %v50 = vld [vmem:[%s1 + $0x30] sm:$0xff]
  %v51 = vld [vmem:[%s1 + $0x38] sm:$0xff]
  %v52 = vld [vmem:[%s1 + $0x40] sm:$0xff]
  %v53 = vld [vmem:[%s1 + $0x48] sm:$0xff]
  %v54 = vld [vmem:[%s1 + $0x50] sm:$0xff]
  %v55 = vld [vmem:[%s1 + $0x58] sm:$0xff]
  %v56 = vld [vmem:[%s1 + $0x60] sm:$0xff]
  %v57 = vld [vmem:[%s1 + $0x68] sm:$0xff]
  %v58 = vld [vmem:[%s1 + $0x70] sm:$0xff]
  %v59 = vld [vmem:[%s1 + $0x78] sm:$0xff]
  %v60 = vld [vmem:[%s2] sm:$0x1]
  %v62 = vlaneseq
  %v63 = vshrl.u32 %v62, 7
  %v64 = vsub.s32 0, %v63
  %v65 = vrot.slane %v60, %v64
  %67 = vmatprep.subr.mxu0 0.0
  %68 = vmatpush1.msra.mxu0 %v59
  %69 = vmatprep.subr.mxu0 0.0
  %70 = vmatpush1.msra.mxu0 %v58
  %71 = vmatprep.subr.mxu0 0.0
  %72 = vmatpush1.msra.mxu0 %v57
  %73 = vmatprep.subr.mxu0 0.0
  %74 = vmatpush1.msra.mxu0 %v56
  %75 = vmatprep.subr.mxu0 0.0
  %76 = vmatpush1.msra.mxu0 %v55
  %77 = vmatprep.subr.mxu0 0.0
  %78 = vmatpush1.msra.mxu0 %v54
  %79 = vmatprep.subr.mxu0 0.0
  %80 = vmatpush1.msra.mxu0 %v53
  %81 = vmatprep.subr.mxu0 0.0
  %82 = vmatpush1.msra.mxu0 %v52
  %83 = vmatprep.subr.mxu0 0.0
  %84 = vmatpush1.msra.mxu0 %v51
  %85 = vmatprep.subr.mxu0 0.0
  %86 = vmatpush1.msra.mxu0 %v50
  %87 = vmatprep.subr.mxu0 0.0
  %88 = vmatpush1.msra.mxu0 %v49
  %89 = vmatprep.subr.mxu0 0.0
  %90 = vmatpush1.msra.mxu0 %v48
  %91 = vmatprep.subr.mxu0 0.0
  %92 = vmatpush1.msra.mxu0 %v47
  %93 = vmatprep.subr.mxu0 0.0
  %94 = vmatpush1.msra.mxu0 %v46
  %95 = vmatprep.subr.mxu0 0.0
  %96 = vmatpush1.msra.mxu0 %v45
  %97 = vmatprep.subr.mxu0 0.0
  %98 = vmatpush1.msra.mxu0 %v44
  %99 = vmatprep.subr.mxu0 0.0
  %100 = vmatpush2.msra.mxu0 0.0
  %101 = vmatprep.subr.mxu0 0.0
  %102 = vmatpush2.msra.mxu0 0.0
  %103 = vmatprep.subr.mxu0 0.0
  %104 = vmatpush2.msra.mxu0 0.0
  %105 = vmatprep.subr.mxu0 0.0
  %106 = vmatpush2.msra.mxu0 0.0
  %107 = vmatprep.subr.mxu0 0.0
  %108 = vmatpush2.msra.mxu0 0.0
  %109 = vmatprep.subr.mxu0 0.0
  %110 = vmatpush2.msra.mxu0 0.0
  %111 = vmatprep.subr.mxu0 0.0
  %112 = vmatpush2.msra.mxu0 0.0
  %113 = vmatprep.subr.mxu0 0.0
  %114 = vmatpush2.msra.mxu0 0.0
  %115 = vmatprep.subr.mxu0 0.0
  %116 = vmatpush2.msra.mxu0 0.0
  %117 = vmatprep.subr.mxu0 0.0
  %118 = vmatpush2.msra.mxu0 0.0
  %119 = vmatprep.subr.mxu0 0.0
  %120 = vmatpush2.msra.mxu0 0.0
  %121 = vmatprep.subr.mxu0 0.0
  %122 = vmatpush2.msra.mxu0 0.0
  %123 = vmatprep.subr.mxu0 0.0
  %124 = vmatpush2.msra.mxu0 0.0
  %125 = vmatprep.subr.mxu0 0.0
  %126 = vmatpush2.msra.mxu0 0.0
  %127 = vmatprep.subr.mxu0 0.0
  %128 = vmatpush2.msra.mxu0 0.0
  %129 = vmatprep.subr.mxu0 0.0
  %130 = vmatpush2.msra.mxu0 0.0
  %131 = vmatprep.mubr.f32.mxu0 0.0
  %132 = vmatmul.mubr.f32.gmra.mxu0 %v28
  %v133 = vpop.f32.mrf.mxu0
  %v134 = vadd.f32 %v65, %v133
  %v135 = vpop.f32.mrf.mxu0
  %136 = vmatprep.mubr.f32.mxu0 0.0
  %137 = vmatmul.mubr.f32.gmra.mxu0 %v29
  %v138 = vpop.f32.mrf.mxu0
  %v139 = vadd.f32 %v65, %v138
  %v140 = vpop.f32.mrf.mxu0
  %141 = vmatprep.mubr.f32.mxu0 0.0
  %142 = vmatmul.mubr.f32.gmra.mxu0 %v30
  %v143 = vpop.f32.mrf.mxu0
  %v144 = vadd.f32 %v65, %v143
  %v145 = vpop.f32.mrf.mxu0
  %146 = vmatprep.mubr.f32.mxu0 0.0
  %147 = vmatmul.mubr.f32.gmra.mxu0 %v31
  %v148 = vpop.f32.mrf.mxu0
  %v149 = vadd.f32 %v65, %v148
  %v150 = vpop.f32.mrf.mxu0
  %151 = vmatprep.mubr.f32.mxu0 0.0
  %152 = vmatmul.mubr.f32.gmra.mxu0 %v32
  %v153 = vpop.f32.mrf.mxu0
  %v154 = vadd.f32 %v65, %v153
  %v155 = vpop.f32.mrf.mxu0
  %156 = vmatprep.mubr.f32.mxu0 0.0
  %157 = vmatmul.mubr.f32.gmra.mxu0 %v33
  %v158 = vpop.f32.mrf.mxu0
  %v159 = vadd.f32 %v65, %v158
  %v160 = vpop.f32.mrf.mxu0
  %161 = vmatprep.mubr.f32.mxu0 0.0
  %162 = vmatmul.mubr.f32.gmra.mxu0 %v34
  %v163 = vpop.f32.mrf.mxu0
  %v164 = vadd.f32 %v65, %v163
  %v165 = vpop.f32.mrf.mxu0
  %166 = vmatprep.mubr.f32.mxu0 0.0
  %167 = vmatmul.mubr.f32.gmra.mxu0 %v35
  %v168 = vpop.f32.mrf.mxu0
  %v169 = vadd.f32 %v65, %v168
  %v170 = vpop.f32.mrf.mxu0
  %171 = vmatprep.mubr.f32.mxu0 0.0
  %172 = vmatmul.mubr.f32.gmra.mxu0 %v36
  %v173 = vpop.f32.mrf.mxu0
  %v174 = vadd.f32 %v65, %v173
  %v175 = vpop.f32.mrf.mxu0
  %176 = vmatprep.mubr.f32.mxu0 0.0
  %177 = vmatmul.mubr.f32.gmra.mxu0 %v37
  %v178 = vpop.f32.mrf.mxu0
  %v179 = vadd.f32 %v65, %v178
  %v180 = vpop.f32.mrf.mxu0
  %181 = vmatprep.mubr.f32.mxu0 0.0
  %182 = vmatmul.mubr.f32.gmra.mxu0 %v38
  %v183 = vpop.f32.mrf.mxu0
  %v184 = vadd.f32 %v65, %v183
  %v185 = vpop.f32.mrf.mxu0
  %186 = vmatprep.mubr.f32.mxu0 0.0
  %187 = vmatmul.mubr.f32.gmra.mxu0 %v39
  %v188 = vpop.f32.mrf.mxu0
  %v189 = vadd.f32 %v65, %v188
  %v190 = vpop.f32.mrf.mxu0
  %191 = vmatprep.mubr.f32.mxu0 0.0
  %192 = vmatmul.mubr.f32.gmra.mxu0 %v40
  %v193 = vpop.f32.mrf.mxu0
  %v194 = vadd.f32 %v65, %v193
  %v195 = vpop.f32.mrf.mxu0
  %196 = vmatprep.mubr.f32.mxu0 0.0
  %197 = vmatmul.mubr.f32.gmra.mxu0 %v41
  %v198 = vpop.f32.mrf.mxu0
  %v199 = vadd.f32 %v65, %v198
  %v200 = vpop.f32.mrf.mxu0
  %201 = vmatprep.mubr.f32.mxu0 0.0
  %202 = vmatmul.mubr.f32.gmra.mxu0 %v42
  %v203 = vpop.f32.mrf.mxu0
  %v204 = vadd.f32 %v65, %v203
  %v205 = vpop.f32.mrf.mxu0
  %206 = vmatprep.mubr.f32.mxu0 0.0
  %207 = vmatmul.mubr.f32.gmra.mxu0 %v43
  %v208 = vpop.f32.mrf.mxu0
  %v209 = vadd.f32 %v65, %v208
  %v210 = vpop.f32.mrf.mxu0
  %211 = vdwg.mxu0
  %vm212 = vcmp.ge.f32.partialorder %v134, 0.0
  %vm213 = vcmp.ge.f32.partialorder %v139, 0.0
  %vm214 = vcmp.ge.f32.partialorder %v144, 0.0
  %vm215 = vcmp.ge.f32.partialorder %v149, 0.0
  %vm216 = vcmp.ge.f32.partialorder %v154, 0.0
  %vm217 = vcmp.ge.f32.partialorder %v159, 0.0
  %vm218 = vcmp.ge.f32.partialorder %v164, 0.0
  %vm219 = vcmp.ge.f32.partialorder %v169, 0.0
  %vm220 = vcmp.ge.f32.partialorder %v174, 0.0
  %vm221 = vcmp.ge.f32.partialorder %v179, 0.0
  %vm222 = vcmp.ge.f32.partialorder %v184, 0.0
  %vm223 = vcmp.ge.f32.partialorder %v189, 0.0
  %vm224 = vcmp.ge.f32.partialorder %v194, 0.0
  %vm225 = vcmp.ge.f32.partialorder %v199, 0.0
  %vm226 = vcmp.ge.f32.partialorder %v204, 0.0
  %vm227 = vcmp.ge.f32.partialorder %v209, 0.0
  %v228 = vmul.f32 %v134, 0.01
  %v229 = vmul.f32 %v139, 0.01
  %v230 = vmul.f32 %v144, 0.01
  %v231 = vmul.f32 %v149, 0.01
  %v232 = vmul.f32 %v154, 0.01
  %v233 = vmul.f32 %v159, 0.01
  %v234 = vmul.f32 %v164, 0.01
  %v235 = vmul.f32 %v169, 0.01
  %v236 = vmul.f32 %v174, 0.01
  %v237 = vmul.f32 %v179, 0.01
  %v238 = vmul.f32 %v184, 0.01
  %v239 = vmul.f32 %v189, 0.01
  %v240 = vmul.f32 %v194, 0.01
  %v241 = vmul.f32 %v199, 0.01
  %v242 = vmul.f32 %v204, 0.01
  %v243 = vmul.f32 %v209, 0.01
  %v244 = vsel %vm212, %v134, %v228
  %v245 = vsel %vm213, %v139, %v229
  %v246 = vsel %vm214, %v144, %v230
  %v247 = vsel %vm215, %v149, %v231
  %v248 = vsel %vm216, %v154, %v232
  %v249 = vsel %vm217, %v159, %v233
  %v250 = vsel %vm218, %v164, %v234
  %v251 = vsel %vm219, %v169, %v235
  %v252 = vsel %vm220, %v174, %v236
  %v253 = vsel %vm221, %v179, %v237
  %v254 = vsel %vm222, %v184, %v238
  %v255 = vsel %vm223, %v189, %v239
  %v256 = vsel %vm224, %v194, %v240
  %v257 = vsel %vm225, %v199, %v241
  %v258 = vsel %vm226, %v204, %v242
  %v259 = vsel %vm227, %v209, %v243
  %v260 = vld [vmem:[%s3] sm:$0xff]
  %v261 = vld [vmem:[%s3 + $0x8] sm:$0xff]
  %vm262 = vcmask 64512
  %v264 = vsel %vm262, %v245, 0
  %266 = vmatprep.subr.mxu0 0.0
  %267 = vmatpush1.msra.mxu0 0.0
  %268 = vmatprep.subr.mxu0 0.0
  %269 = vmatpush1.msra.mxu0 0.0
  %270 = vmatprep.subr.mxu0 0.0
  %271 = vmatpush1.msra.mxu0 0.0
  %272 = vmatprep.subr.mxu0 0.0
  %273 = vmatpush1.msra.mxu0 0.0
  %274 = vmatprep.subr.mxu0 0.0
  %275 = vmatpush1.msra.mxu0 0.0
  %276 = vmatprep.subr.mxu0 0.0
  %277 = vmatpush1.msra.mxu0 0.0
  %278 = vmatprep.subr.mxu0 0.0
  %279 = vmatpush1.msra.mxu0 0.0
  %280 = vmatprep.subr.mxu0 0.0
  %281 = vmatpush1.msra.mxu0 0.0
  %282 = vmatprep.subr.mxu0 0.0
  %283 = vmatpush1.msra.mxu0 0.0
  %284 = vmatprep.subr.mxu0 0.0
  %285 = vmatpush1.msra.mxu0 0.0
  %286 = vmatprep.subr.mxu0 0.0
  %287 = vmatpush1.msra.mxu0 0.0
  %288 = vmatprep.subr.mxu0 0.0
  %289 = vmatpush1.msra.mxu0 0.0
  %290 = vmatprep.subr.mxu0 0.0
  %291 = vmatpush1.msra.mxu0 0.0
  %292 = vmatprep.subr.mxu0 0.0
  %293 = vmatpush1.msra.mxu0 0.0
  %294 = vmatprep.subr.mxu0 0.0
  %295 = vmatpush1.msra.mxu0 0.0
  %296 = vmatprep.subr.mxu0 0.0
  %297 = vmatpush1.msra.mxu0 %v261
  %298 = vmatprep.subr.mxu0 0.0
  %299 = vmatpush2.msra.mxu0 0.0
  %300 = vmatprep.subr.mxu0 0.0
  %301 = vmatpush2.msra.mxu0 0.0
  %302 = vmatprep.subr.mxu0 0.0
  %303 = vmatpush2.msra.mxu0 0.0
  %304 = vmatprep.subr.mxu0 0.0
  %305 = vmatpush2.msra.mxu0 0.0
  %306 = vmatprep.subr.mxu0 0.0
  %307 = vmatpush2.msra.mxu0 0.0
  %308 = vmatprep.subr.mxu0 0.0
  %309 = vmatpush2.msra.mxu0 0.0
  %310 = vmatprep.subr.mxu0 0.0
  %311 = vmatpush2.msra.mxu0 0.0
  %312 = vmatprep.subr.mxu0 0.0
  %313 = vmatpush2.msra.mxu0 0.0
  %314 = vmatprep.subr.mxu0 0.0
  %315 = vmatpush2.msra.mxu0 0.0
  %316 = vmatprep.subr.mxu0 0.0
  %317 = vmatpush2.msra.mxu0 0.0
  %318 = vmatprep.subr.mxu0 0.0
  %319 = vmatpush2.msra.mxu0 0.0
  %320 = vmatprep.subr.mxu0 0.0
  %321 = vmatpush2.msra.mxu0 0.0
  %322 = vmatprep.subr.mxu0 0.0
  %323 = vmatpush2.msra.mxu0 0.0
  %324 = vmatprep.subr.mxu0 0.0
  %325 = vmatpush2.msra.mxu0 0.0
  %326 = vmatprep.subr.mxu0 0.0
  %327 = vmatpush2.msra.mxu0 0.0
  %328 = vmatprep.subr.mxu0 0.0
  %329 = vmatpush2.msra.mxu0 0.0
  %330 = vmatprep.mubr.f32.mxu0 0.0
  %331 = vmatmul.mubr.f32.gmra.mxu0 %v264
  %v332 = vpop.f32.mrf.mxu0
  %v333 = vadd.f32 0.0, %v332
  %v334 = vpop.f32.mrf.mxu0
  %335 = vdwg.mxu0
  %v337 = vsel %vm262, %v244, 0
  %339 = vmatprep.subr.mxu0 0.0
  %340 = vmatpush1.msra.mxu0 0.0
  %341 = vmatprep.subr.mxu0 0.0
  %342 = vmatpush1.msra.mxu0 0.0
  %343 = vmatprep.subr.mxu0 0.0
  %344 = vmatpush1.msra.mxu0 0.0
  %345 = vmatprep.subr.mxu0 0.0
  %346 = vmatpush1.msra.mxu0 0.0
  %347 = vmatprep.subr.mxu0 0.0
  %348 = vmatpush1.msra.mxu0 0.0
  %349 = vmatprep.subr.mxu0 0.0
  %350 = vmatpush1.msra.mxu0 0.0
  %351 = vmatprep.subr.mxu0 0.0
  %352 = vmatpush1.msra.mxu0 0.0
  %353 = vmatprep.subr.mxu0 0.0
  %354 = vmatpush1.msra.mxu0 0.0
  %355 = vmatprep.subr.mxu0 0.0
  %356 = vmatpush1.msra.mxu0 0.0
  %357 = vmatprep.subr.mxu0 0.0
  %358 = vmatpush1.msra.mxu0 0.0
  %359 = vmatprep.subr.mxu0 0.0
  %360 = vmatpush1.msra.mxu0 0.0
  %361 = vmatprep.subr.mxu0 0.0
  %362 = vmatpush1.msra.mxu0 0.0
  %363 = vmatprep.subr.mxu0 0.0
  %364 = vmatpush1.msra.mxu0 0.0
  %365 = vmatprep.subr.mxu0 0.0
  %366 = vmatpush1.msra.mxu0 0.0
  %367 = vmatprep.subr.mxu0 0.0
  %368 = vmatpush1.msra.mxu0 0.0
  %369 = vmatprep.subr.mxu0 0.0
  %370 = vmatpush1.msra.mxu0 %v260
  %371 = vmatprep.subr.mxu0 0.0
  %372 = vmatpush2.msra.mxu0 0.0
  %373 = vmatprep.subr.mxu0 0.0
  %374 = vmatpush2.msra.mxu0 0.0
  %375 = vmatprep.subr.mxu0 0.0
  %376 = vmatpush2.msra.mxu0 0.0
  %377 = vmatprep.subr.mxu0 0.0
  %378 = vmatpush2.msra.mxu0 0.0
  %379 = vmatprep.subr.mxu0 0.0
  %380 = vmatpush2.msra.mxu0 0.0
  %381 = vmatprep.subr.mxu0 0.0
  %382 = vmatpush2.msra.mxu0 0.0
  %383 = vmatprep.subr.mxu0 0.0
  %384 = vmatpush2.msra.mxu0 0.0
  %385 = vmatprep.subr.mxu0 0.0
  %386 = vmatpush2.msra.mxu0 0.0
  %387 = vmatprep.subr.mxu0 0.0
  %388 = vmatpush2.msra.mxu0 0.0
  %389 = vmatprep.subr.mxu0 0.0
  %390 = vmatpush2.msra.mxu0 0.0
  %391 = vmatprep.subr.mxu0 0.0
  %392 = vmatpush2.msra.mxu0 0.0
  %393 = vmatprep.subr.mxu0 0.0
  %394 = vmatpush2.msra.mxu0 0.0
  %395 = vmatprep.subr.mxu0 0.0
  %396 = vmatpush2.msra.mxu0 0.0
  %397 = vmatprep.subr.mxu0 0.0
  %398 = vmatpush2.msra.mxu0 0.0
  %399 = vmatprep.subr.mxu0 0.0
  %400 = vmatpush2.msra.mxu0 0.0
  %401 = vmatprep.subr.mxu0 0.0
  %402 = vmatpush2.msra.mxu0 0.0
  %403 = vmatprep.mubr.f32.mxu0 0.0
  %404 = vmatmul.mubr.f32.gmra.mxu0 %v337
  %v405 = vpop.f32.mrf.mxu0
  %v406 = vadd.f32 %v333, %v405
  %v407 = vpop.f32.mrf.mxu0
  %408 = vdwg.mxu0
  %v409 = vld [vmem:[%s3 + $0x10] sm:$0xff]
  %v411 = vsel %vm262, %v246, 0
  %413 = vmatprep.subr.mxu0 0.0
  %414 = vmatpush1.msra.mxu0 0.0
  %415 = vmatprep.subr.mxu0 0.0
  %416 = vmatpush1.msra.mxu0 0.0
  %417 = vmatprep.subr.mxu0 0.0
  %418 = vmatpush1.msra.mxu0 0.0
  %419 = vmatprep.subr.mxu0 0.0
  %420 = vmatpush1.msra.mxu0 0.0
  %421 = vmatprep.subr.mxu0 0.0
  %422 = vmatpush1.msra.mxu0 0.0
  %423 = vmatprep.subr.mxu0 0.0
  %424 = vmatpush1.msra.mxu0 0.0
  %425 = vmatprep.subr.mxu0 0.0
  %426 = vmatpush1.msra.mxu0 0.0
  %427 = vmatprep.subr.mxu0 0.0
  %428 = vmatpush1.msra.mxu0 0.0
  %429 = vmatprep.subr.mxu0 0.0
  %430 = vmatpush1.msra.mxu0 0.0
  %431 = vmatprep.subr.mxu0 0.0
  %432 = vmatpush1.msra.mxu0 0.0
  %433 = vmatprep.subr.mxu0 0.0
  %434 = vmatpush1.msra.mxu0 0.0
  %435 = vmatprep.subr.mxu0 0.0
  %436 = vmatpush1.msra.mxu0 0.0
  %437 = vmatprep.subr.mxu0 0.0
  %438 = vmatpush1.msra.mxu0 0.0
  %439 = vmatprep.subr.mxu0 0.0
  %440 = vmatpush1.msra.mxu0 0.0
  %441 = vmatprep.subr.mxu0 0.0
  %442 = vmatpush1.msra.mxu0 0.0
  %443 = vmatprep.subr.mxu0 0.0
  %444 = vmatpush1.msra.mxu0 %v409
  %445 = vmatprep.subr.mxu0 0.0
  %446 = vmatpush2.msra.mxu0 0.0
  %447 = vmatprep.subr.mxu0 0.0
  %448 = vmatpush2.msra.mxu0 0.0
  %449 = vmatprep.subr.mxu0 0.0
  %450 = vmatpush2.msra.mxu0 0.0
  %451 = vmatprep.subr.mxu0 0.0
  %452 = vmatpush2.msra.mxu0 0.0
  %453 = vmatprep.subr.mxu0 0.0
  %454 = vmatpush2.msra.mxu0 0.0
  %455 = vmatprep.subr.mxu0 0.0
  %456 = vmatpush2.msra.mxu0 0.0
  %457 = vmatprep.subr.mxu0 0.0
  %458 = vmatpush2.msra.mxu0 0.0
  %459 = vmatprep.subr.mxu0 0.0
  %460 = vmatpush2.msra.mxu0 0.0
  %461 = vmatprep.subr.mxu0 0.0
  %462 = vmatpush2.msra.mxu0 0.0
  %463 = vmatprep.subr.mxu0 0.0
  %464 = vmatpush2.msra.mxu0 0.0
  %465 = vmatprep.subr.mxu0 0.0
  %466 = vmatpush2.msra.mxu0 0.0
  %467 = vmatprep.subr.mxu0 0.0
  %468 = vmatpush2.msra.mxu0 0.0
  %469 = vmatprep.subr.mxu0 0.0
  %470 = vmatpush2.msra.mxu0 0.0
  %471 = vmatprep.subr.mxu0 0.0
  %472 = vmatpush2.msra.mxu0 0.0
  %473 = vmatprep.subr.mxu0 0.0
  %474 = vmatpush2.msra.mxu0 0.0
  %475 = vmatprep.subr.mxu0 0.0
  %476 = vmatpush2.msra.mxu0 0.0
  %477 = vmatprep.mubr.f32.mxu0 0.0
  %478 = vmatmul.mubr.f32.gmra.mxu0 %v411
  %v479 = vpop.f32.mrf.mxu0
  %v480 = vadd.f32 0.0, %v479
  %v481 = vpop.f32.mrf.mxu0
  %482 = vdwg.mxu0
  %v483 = vadd.f32 %v406, %v480
  %v484 = vld [vmem:[%s3 + $0x18] sm:$0xff]
  %v486 = vsel %vm262, %v247, 0
  %488 = vmatprep.subr.mxu0 0.0
  %489 = vmatpush1.msra.mxu0 0.0
  %490 = vmatprep.subr.mxu0 0.0
  %491 = vmatpush1.msra.mxu0 0.0
  %492 = vmatprep.subr.mxu0 0.0
  %493 = vmatpush1.msra.mxu0 0.0
  %494 = vmatprep.subr.mxu0 0.0
  %495 = vmatpush1.msra.mxu0 0.0
  %496 = vmatprep.subr.mxu0 0.0
  %497 = vmatpush1.msra.mxu0 0.0
  %498 = vmatprep.subr.mxu0 0.0
  %499 = vmatpush1.msra.mxu0 0.0
  %500 = vmatprep.subr.mxu0 0.0
  %501 = vmatpush1.msra.mxu0 0.0
  %502 = vmatprep.subr.mxu0 0.0
  %503 = vmatpush1.msra.mxu0 0.0
  %504 = vmatprep.subr.mxu0 0.0
  %505 = vmatpush1.msra.mxu0 0.0
  %506 = vmatprep.subr.mxu0 0.0
  %507 = vmatpush1.msra.mxu0 0.0
  %508 = vmatprep.subr.mxu0 0.0
  %509 = vmatpush1.msra.mxu0 0.0
  %510 = vmatprep.subr.mxu0 0.0
  %511 = vmatpush1.msra.mxu0 0.0
  %512 = vmatprep.subr.mxu0 0.0
  %513 = vmatpush1.msra.mxu0 0.0
  %514 = vmatprep.subr.mxu0 0.0
  %515 = vmatpush1.msra.mxu0 0.0
  %516 = vmatprep.subr.mxu0 0.0
  %517 = vmatpush1.msra.mxu0 0.0
  %518 = vmatprep.subr.mxu0 0.0
  %519 = vmatpush1.msra.mxu0 %v484
  %520 = vmatprep.subr.mxu0 0.0
  %521 = vmatpush2.msra.mxu0 0.0
  %522 = vmatprep.subr.mxu0 0.0
  %523 = vmatpush2.msra.mxu0 0.0
  %524 = vmatprep.subr.mxu0 0.0
  %525 = vmatpush2.msra.mxu0 0.0
  %526 = vmatprep.subr.mxu0 0.0
  %527 = vmatpush2.msra.mxu0 0.0
  %528 = vmatprep.subr.mxu0 0.0
  %529 = vmatpush2.msra.mxu0 0.0
  %530 = vmatprep.subr.mxu0 0.0
  %531 = vmatpush2.msra.mxu0 0.0
  %532 = vmatprep.subr.mxu0 0.0
  %533 = vmatpush2.msra.mxu0 0.0
  %534 = vmatprep.subr.mxu0 0.0
  %535 = vmatpush2.msra.mxu0 0.0
  %536 = vmatprep.subr.mxu0 0.0
  %537 = vmatpush2.msra.mxu0 0.0
  %538 = vmatprep.subr.mxu0 0.0
  %539 = vmatpush2.msra.mxu0 0.0
  %540 = vmatprep.subr.mxu0 0.0
  %541 = vmatpush2.msra.mxu0 0.0
  %542 = vmatprep.subr.mxu0 0.0
  %543 = vmatpush2.msra.mxu0 0.0
  %544 = vmatprep.subr.mxu0 0.0
  %545 = vmatpush2.msra.mxu0 0.0
  %546 = vmatprep.subr.mxu0 0.0
  %547 = vmatpush2.msra.mxu0 0.0
  %548 = vmatprep.subr.mxu0 0.0
  %549 = vmatpush2.msra.mxu0 0.0
  %550 = vmatprep.subr.mxu0 0.0
  %551 = vmatpush2.msra.mxu0 0.0
  %552 = vmatprep.mubr.f32.mxu0 0.0
  %553 = vmatmul.mubr.f32.gmra.mxu0 %v486
  %v554 = vpop.f32.mrf.mxu0
  %v555 = vadd.f32 0.0, %v554
  %v556 = vpop.f32.mrf.mxu0
  %557 = vdwg.mxu0
  %v558 = vadd.f32 %v483, %v555
  %v559 = vld [vmem:[%s3 + $0x20] sm:$0xff]
  %v561 = vsel %vm262, %v248, 0
  %563 = vmatprep.subr.mxu0 0.0
  %564 = vmatpush1.msra.mxu0 0.0
  %565 = vmatprep.subr.mxu0 0.0
  %566 = vmatpush1.msra.mxu0 0.0
  %567 = vmatprep.subr.mxu0 0.0
  %568 = vmatpush1.msra.mxu0 0.0
  %569 = vmatprep.subr.mxu0 0.0
  %570 = vmatpush1.msra.mxu0 0.0
  %571 = vmatprep.subr.mxu0 0.0
  %572 = vmatpush1.msra.mxu0 0.0
  %573 = vmatprep.subr.mxu0 0.0
  %574 = vmatpush1.msra.mxu0 0.0
  %575 = vmatprep.subr.mxu0 0.0
  %576 = vmatpush1.msra.mxu0 0.0
  %577 = vmatprep.subr.mxu0 0.0
  %578 = vmatpush1.msra.mxu0 0.0
  %579 = vmatprep.subr.mxu0 0.0
  %580 = vmatpush1.msra.mxu0 0.0
  %581 = vmatprep.subr.mxu0 0.0
  %582 = vmatpush1.msra.mxu0 0.0
  %583 = vmatprep.subr.mxu0 0.0
  %584 = vmatpush1.msra.mxu0 0.0
  %585 = vmatprep.subr.mxu0 0.0
  %586 = vmatpush1.msra.mxu0 0.0
  %587 = vmatprep.subr.mxu0 0.0
  %588 = vmatpush1.msra.mxu0 0.0
  %589 = vmatprep.subr.mxu0 0.0
  %590 = vmatpush1.msra.mxu0 0.0
  %591 = vmatprep.subr.mxu0 0.0
  %592 = vmatpush1.msra.mxu0 0.0
  %593 = vmatprep.subr.mxu0 0.0
  %594 = vmatpush1.msra.mxu0 %v559
  %595 = vmatprep.subr.mxu0 0.0
  %596 = vmatpush2.msra.mxu0 0.0
  %597 = vmatprep.subr.mxu0 0.0
  %598 = vmatpush2.msra.mxu0 0.0
  %599 = vmatprep.subr.mxu0 0.0
  %600 = vmatpush2.msra.mxu0 0.0
  %601 = vmatprep.subr.mxu0 0.0
  %602 = vmatpush2.msra.mxu0 0.0
  %603 = vmatprep.subr.mxu0 0.0
  %604 = vmatpush2.msra.mxu0 0.0
  %605 = vmatprep.subr.mxu0 0.0
  %606 = vmatpush2.msra.mxu0 0.0
  %607 = vmatprep.subr.mxu0 0.0
  %608 = vmatpush2.msra.mxu0 0.0
  %609 = vmatprep.subr.mxu0 0.0
  %610 = vmatpush2.msra.mxu0 0.0
  %611 = vmatprep.subr.mxu0 0.0
  %612 = vmatpush2.msra.mxu0 0.0
  %613 = vmatprep.subr.mxu0 0.0
  %614 = vmatpush2.msra.mxu0 0.0
  %615 = vmatprep.subr.mxu0 0.0
  %616 = vmatpush2.msra.mxu0 0.0
  %617 = vmatprep.subr.mxu0 0.0
  %618 = vmatpush2.msra.mxu0 0.0
  %619 = vmatprep.subr.mxu0 0.0
  %620 = vmatpush2.msra.mxu0 0.0
  %621 = vmatprep.subr.mxu0 0.0
  %622 = vmatpush2.msra.mxu0 0.0
  %623 = vmatprep.subr.mxu0 0.0
  %624 = vmatpush2.msra.mxu0 0.0
  %625 = vmatprep.subr.mxu0 0.0
  %626 = vmatpush2.msra.mxu0 0.0
  %627 = vmatprep.mubr.f32.mxu0 0.0
  %628 = vmatmul.mubr.f32.gmra.mxu0 %v561
  %v629 = vpop.f32.mrf.mxu0
  %v630 = vadd.f32 0.0, %v629
  %v631 = vpop.f32.mrf.mxu0
  %632 = vdwg.mxu0
  %v633 = vadd.f32 %v558, %v630
  %v634 = vld [vmem:[%s3 + $0x28] sm:$0xff]
  %v636 = vsel %vm262, %v249, 0
  %638 = vmatprep.subr.mxu0 0.0
  %639 = vmatpush1.msra.mxu0 0.0
  %640 = vmatprep.subr.mxu0 0.0
  %641 = vmatpush1.msra.mxu0 0.0
  %642 = vmatprep.subr.mxu0 0.0
  %643 = vmatpush1.msra.mxu0 0.0
  %644 = vmatprep.subr.mxu0 0.0
  %645 = vmatpush1.msra.mxu0 0.0
  %646 = vmatprep.subr.mxu0 0.0
  %647 = vmatpush1.msra.mxu0 0.0
  %648 = vmatprep.subr.mxu0 0.0
  %649 = vmatpush1.msra.mxu0 0.0
  %650 = vmatprep.subr.mxu0 0.0
  %651 = vmatpush1.msra.mxu0 0.0
  %652 = vmatprep.subr.mxu0 0.0
  %653 = vmatpush1.msra.mxu0 0.0
  %654 = vmatprep.subr.mxu0 0.0
  %655 = vmatpush1.msra.mxu0 0.0
  %656 = vmatprep.subr.mxu0 0.0
  %657 = vmatpush1.msra.mxu0 0.0
  %658 = vmatprep.subr.mxu0 0.0
  %659 = vmatpush1.msra.mxu0 0.0
  %660 = vmatprep.subr.mxu0 0.0
  %661 = vmatpush1.msra.mxu0 0.0
  %662 = vmatprep.subr.mxu0 0.0
  %663 = vmatpush1.msra.mxu0 0.0
  %664 = vmatprep.subr.mxu0 0.0
  %665 = vmatpush1.msra.mxu0 0.0
  %666 = vmatprep.subr.mxu0 0.0
  %667 = vmatpush1.msra.mxu0 0.0
  %668 = vmatprep.subr.mxu0 0.0
  %669 = vmatpush1.msra.mxu0 %v634
  %670 = vmatprep.subr.mxu0 0.0
  %671 = vmatpush2.msra.mxu0 0.0
  %672 = vmatprep.subr.mxu0 0.0
  %673 = vmatpush2.msra.mxu0 0.0
  %674 = vmatprep.subr.mxu0 0.0
  %675 = vmatpush2.msra.mxu0 0.0
  %676 = vmatprep.subr.mxu0 0.0
  %677 = vmatpush2.msra.mxu0 0.0
  %678 = vmatprep.subr.mxu0 0.0
  %679 = vmatpush2.msra.mxu0 0.0
  %680 = vmatprep.subr.mxu0 0.0
  %681 = vmatpush2.msra.mxu0 0.0
  %682 = vmatprep.subr.mxu0 0.0
  %683 = vmatpush2.msra.mxu0 0.0
  %684 = vmatprep.subr.mxu0 0.0
  %685 = vmatpush2.msra.mxu0 0.0
  %686 = vmatprep.subr.mxu0 0.0
  %687 = vmatpush2.msra.mxu0 0.0
  %688 = vmatprep.subr.mxu0 0.0
  %689 = vmatpush2.msra.mxu0 0.0
  %690 = vmatprep.subr.mxu0 0.0
  %691 = vmatpush2.msra.mxu0 0.0
  %692 = vmatprep.subr.mxu0 0.0
  %693 = vmatpush2.msra.mxu0 0.0
  %694 = vmatprep.subr.mxu0 0.0
  %695 = vmatpush2.msra.mxu0 0.0
  %696 = vmatprep.subr.mxu0 0.0
  %697 = vmatpush2.msra.mxu0 0.0
  %698 = vmatprep.subr.mxu0 0.0
  %699 = vmatpush2.msra.mxu0 0.0
  %700 = vmatprep.subr.mxu0 0.0
  %701 = vmatpush2.msra.mxu0 0.0
  %702 = vmatprep.mubr.f32.mxu0 0.0
  %703 = vmatmul.mubr.f32.gmra.mxu0 %v636
  %v704 = vpop.f32.mrf.mxu0
  %v705 = vadd.f32 0.0, %v704
  %v706 = vpop.f32.mrf.mxu0
  %707 = vdwg.mxu0
  %v708 = vadd.f32 %v633, %v705
  %v709 = vld [vmem:[%s3 + $0x30] sm:$0xff]
  %v711 = vsel %vm262, %v250, 0
  %713 = vmatprep.subr.mxu0 0.0
  %714 = vmatpush1.msra.mxu0 0.0
  %715 = vmatprep.subr.mxu0 0.0
  %716 = vmatpush1.msra.mxu0 0.0
  %717 = vmatprep.subr.mxu0 0.0
  %718 = vmatpush1.msra.mxu0 0.0
  %719 = vmatprep.subr.mxu0 0.0
  %720 = vmatpush1.msra.mxu0 0.0
  %721 = vmatprep.subr.mxu0 0.0
  %722 = vmatpush1.msra.mxu0 0.0
  %723 = vmatprep.subr.mxu0 0.0
  %724 = vmatpush1.msra.mxu0 0.0
  %725 = vmatprep.subr.mxu0 0.0
  %726 = vmatpush1.msra.mxu0 0.0
  %727 = vmatprep.subr.mxu0 0.0
  %728 = vmatpush1.msra.mxu0 0.0
  %729 = vmatprep.subr.mxu0 0.0
  %730 = vmatpush1.msra.mxu0 0.0
  %731 = vmatprep.subr.mxu0 0.0
  %732 = vmatpush1.msra.mxu0 0.0
  %733 = vmatprep.subr.mxu0 0.0
  %734 = vmatpush1.msra.mxu0 0.0
  %735 = vmatprep.subr.mxu0 0.0
  %736 = vmatpush1.msra.mxu0 0.0
  %737 = vmatprep.subr.mxu0 0.0
  %738 = vmatpush1.msra.mxu0 0.0
  %739 = vmatprep.subr.mxu0 0.0
  %740 = vmatpush1.msra.mxu0 0.0
  %741 = vmatprep.subr.mxu0 0.0
  %742 = vmatpush1.msra.mxu0 0.0
  %743 = vmatprep.subr.mxu0 0.0
  %744 = vmatpush1.msra.mxu0 %v709
  %745 = vmatprep.subr.mxu0 0.0
  %746 = vmatpush2.msra.mxu0 0.0
  %747 = vmatprep.subr.mxu0 0.0
  %748 = vmatpush2.msra.mxu0 0.0
  %749 = vmatprep.subr.mxu0 0.0
  %750 = vmatpush2.msra.mxu0 0.0
  %751 = vmatprep.subr.mxu0 0.0
  %752 = vmatpush2.msra.mxu0 0.0
  %753 = vmatprep.subr.mxu0 0.0
  %754 = vmatpush2.msra.mxu0 0.0
  %755 = vmatprep.subr.mxu0 0.0
  %756 = vmatpush2.msra.mxu0 0.0
  %757 = vmatprep.subr.mxu0 0.0
  %758 = vmatpush2.msra.mxu0 0.0
  %759 = vmatprep.subr.mxu0 0.0
  %760 = vmatpush2.msra.mxu0 0.0
  %761 = vmatprep.subr.mxu0 0.0
  %762 = vmatpush2.msra.mxu0 0.0
  %763 = vmatprep.subr.mxu0 0.0
  %764 = vmatpush2.msra.mxu0 0.0
  %765 = vmatprep.subr.mxu0 0.0
  %766 = vmatpush2.msra.mxu0 0.0
  %767 = vmatprep.subr.mxu0 0.0
  %768 = vmatpush2.msra.mxu0 0.0
  %769 = vmatprep.subr.mxu0 0.0
  %770 = vmatpush2.msra.mxu0 0.0
  %771 = vmatprep.subr.mxu0 0.0
  %772 = vmatpush2.msra.mxu0 0.0
  %773 = vmatprep.subr.mxu0 0.0
  %774 = vmatpush2.msra.mxu0 0.0
  %775 = vmatprep.subr.mxu0 0.0
  %776 = vmatpush2.msra.mxu0 0.0
  %777 = vmatprep.mubr.f32.mxu0 0.0
  %778 = vmatmul.mubr.f32.gmra.mxu0 %v711
  %v779 = vpop.f32.mrf.mxu0
  %v780 = vadd.f32 0.0, %v779
  %v781 = vpop.f32.mrf.mxu0
  %782 = vdwg.mxu0
  %v783 = vadd.f32 %v708, %v780
  %v784 = vld [vmem:[%s3 + $0x38] sm:$0xff]
  %v786 = vsel %vm262, %v251, 0
  %788 = vmatprep.subr.mxu0 0.0
  %789 = vmatpush1.msra.mxu0 0.0
  %790 = vmatprep.subr.mxu0 0.0
  %791 = vmatpush1.msra.mxu0 0.0
  %792 = vmatprep.subr.mxu0 0.0
  %793 = vmatpush1.msra.mxu0 0.0
  %794 = vmatprep.subr.mxu0 0.0
  %795 = vmatpush1.msra.mxu0 0.0
  %796 = vmatprep.subr.mxu0 0.0
  %797 = vmatpush1.msra.mxu0 0.0
  %798 = vmatprep.subr.mxu0 0.0
  %799 = vmatpush1.msra.mxu0 0.0
  %800 = vmatprep.subr.mxu0 0.0
  %801 = vmatpush1.msra.mxu0 0.0
  %802 = vmatprep.subr.mxu0 0.0
  %803 = vmatpush1.msra.mxu0 0.0
  %804 = vmatprep.subr.mxu0 0.0
  %805 = vmatpush1.msra.mxu0 0.0
  %806 = vmatprep.subr.mxu0 0.0
  %807 = vmatpush1.msra.mxu0 0.0
  %808 = vmatprep.subr.mxu0 0.0
  %809 = vmatpush1.msra.mxu0 0.0
  %810 = vmatprep.subr.mxu0 0.0
  %811 = vmatpush1.msra.mxu0 0.0
  %812 = vmatprep.subr.mxu0 0.0
  %813 = vmatpush1.msra.mxu0 0.0
  %814 = vmatprep.subr.mxu0 0.0
  %815 = vmatpush1.msra.mxu0 0.0
  %816 = vmatprep.subr.mxu0 0.0
  %817 = vmatpush1.msra.mxu0 0.0
  %818 = vmatprep.subr.mxu0 0.0
  %819 = vmatpush1.msra.mxu0 %v784
  %820 = vmatprep.subr.mxu0 0.0
  %821 = vmatpush2.msra.mxu0 0.0
  %822 = vmatprep.subr.mxu0 0.0
  %823 = vmatpush2.msra.mxu0 0.0
  %824 = vmatprep.subr.mxu0 0.0
  %825 = vmatpush2.msra.mxu0 0.0
  %826 = vmatprep.subr.mxu0 0.0
  %827 = vmatpush2.msra.mxu0 0.0
  %828 = vmatprep.subr.mxu0 0.0
  %829 = vmatpush2.msra.mxu0 0.0
  %830 = vmatprep.subr.mxu0 0.0
  %831 = vmatpush2.msra.mxu0 0.0
  %832 = vmatprep.subr.mxu0 0.0
  %833 = vmatpush2.msra.mxu0 0.0
  %834 = vmatprep.subr.mxu0 0.0
  %835 = vmatpush2.msra.mxu0 0.0
  %836 = vmatprep.subr.mxu0 0.0
  %837 = vmatpush2.msra.mxu0 0.0
  %838 = vmatprep.subr.mxu0 0.0
  %839 = vmatpush2.msra.mxu0 0.0
  %840 = vmatprep.subr.mxu0 0.0
  %841 = vmatpush2.msra.mxu0 0.0
  %842 = vmatprep.subr.mxu0 0.0
  %843 = vmatpush2.msra.mxu0 0.0
  %844 = vmatprep.subr.mxu0 0.0
  %845 = vmatpush2.msra.mxu0 0.0
  %846 = vmatprep.subr.mxu0 0.0
  %847 = vmatpush2.msra.mxu0 0.0
  %848 = vmatprep.subr.mxu0 0.0
  %849 = vmatpush2.msra.mxu0 0.0
  %850 = vmatprep.subr.mxu0 0.0
  %851 = vmatpush2.msra.mxu0 0.0
  %852 = vmatprep.mubr.f32.mxu0 0.0
  %853 = vmatmul.mubr.f32.gmra.mxu0 %v786
  %v854 = vpop.f32.mrf.mxu0
  %v855 = vadd.f32 0.0, %v854
  %v856 = vpop.f32.mrf.mxu0
  %857 = vdwg.mxu0
  %v858 = vadd.f32 %v783, %v855
  %v859 = vld [vmem:[%s3 + $0x40] sm:$0xff]
  %v861 = vsel %vm262, %v252, 0
  %863 = vmatprep.subr.mxu0 0.0
  %864 = vmatpush1.msra.mxu0 0.0
  %865 = vmatprep.subr.mxu0 0.0
  %866 = vmatpush1.msra.mxu0 0.0
  %867 = vmatprep.subr.mxu0 0.0
  %868 = vmatpush1.msra.mxu0 0.0
  %869 = vmatprep.subr.mxu0 0.0
  %870 = vmatpush1.msra.mxu0 0.0
  %871 = vmatprep.subr.mxu0 0.0
  %872 = vmatpush1.msra.mxu0 0.0
  %873 = vmatprep.subr.mxu0 0.0
  %874 = vmatpush1.msra.mxu0 0.0
  %875 = vmatprep.subr.mxu0 0.0
  %876 = vmatpush1.msra.mxu0 0.0
  %877 = vmatprep.subr.mxu0 0.0
  %878 = vmatpush1.msra.mxu0 0.0
  %879 = vmatprep.subr.mxu0 0.0
  %880 = vmatpush1.msra.mxu0 0.0
  %881 = vmatprep.subr.mxu0 0.0
  %882 = vmatpush1.msra.mxu0 0.0
  %883 = vmatprep.subr.mxu0 0.0
  %884 = vmatpush1.msra.mxu0 0.0
  %885 = vmatprep.subr.mxu0 0.0
  %886 = vmatpush1.msra.mxu0 0.0
  %887 = vmatprep.subr.mxu0 0.0
  %888 = vmatpush1.msra.mxu0 0.0
  %889 = vmatprep.subr.mxu0 0.0
  %890 = vmatpush1.msra.mxu0 0.0
  %891 = vmatprep.subr.mxu0 0.0
  %892 = vmatpush1.msra.mxu0 0.0
  %893 = vmatprep.subr.mxu0 0.0
  %894 = vmatpush1.msra.mxu0 %v859
  %895 = vmatprep.subr.mxu0 0.0
  %896 = vmatpush2.msra.mxu0 0.0
  %897 = vmatprep.subr.mxu0 0.0
  %898 = vmatpush2.msra.mxu0 0.0
  %899 = vmatprep.subr.mxu0 0.0
  %900 = vmatpush2.msra.mxu0 0.0
  %901 = vmatprep.subr.mxu0 0.0
  %902 = vmatpush2.msra.mxu0 0.0
  %903 = vmatprep.subr.mxu0 0.0
  %904 = vmatpush2.msra.mxu0 0.0
  %905 = vmatprep.subr.mxu0 0.0
  %906 = vmatpush2.msra.mxu0 0.0
  %907 = vmatprep.subr.mxu0 0.0
  %908 = vmatpush2.msra.mxu0 0.0
  %909 = vmatprep.subr.mxu0 0.0
  %910 = vmatpush2.msra.mxu0 0.0
  %911 = vmatprep.subr.mxu0 0.0
  %912 = vmatpush2.msra.mxu0 0.0
  %913 = vmatprep.subr.mxu0 0.0
  %914 = vmatpush2.msra.mxu0 0.0
  %915 = vmatprep.subr.mxu0 0.0
  %916 = vmatpush2.msra.mxu0 0.0
  %917 = vmatprep.subr.mxu0 0.0
  %918 = vmatpush2.msra.mxu0 0.0
  %919 = vmatprep.subr.mxu0 0.0
  %920 = vmatpush2.msra.mxu0 0.0
  %921 = vmatprep.subr.mxu0 0.0
  %922 = vmatpush2.msra.mxu0 0.0
  %923 = vmatprep.subr.mxu0 0.0
  %924 = vmatpush2.msra.mxu0 0.0
  %925 = vmatprep.subr.mxu0 0.0
  %926 = vmatpush2.msra.mxu0 0.0
  %927 = vmatprep.mubr.f32.mxu0 0.0
  %928 = vmatmul.mubr.f32.gmra.mxu0 %v861
  %v929 = vpop.f32.mrf.mxu0
  %v930 = vadd.f32 0.0, %v929
  %v931 = vpop.f32.mrf.mxu0
  %932 = vdwg.mxu0
  %v933 = vadd.f32 %v858, %v930
  %v934 = vld [vmem:[%s3 + $0x48] sm:$0xff]
  %v936 = vsel %vm262, %v253, 0
  %938 = vmatprep.subr.mxu0 0.0
  %939 = vmatpush1.msra.mxu0 0.0
  %940 = vmatprep.subr.mxu0 0.0
  %941 = vmatpush1.msra.mxu0 0.0
  %942 = vmatprep.subr.mxu0 0.0
  %943 = vmatpush1.msra.mxu0 0.0
  %944 = vmatprep.subr.mxu0 0.0
  %945 = vmatpush1.msra.mxu0 0.0
  %946 = vmatprep.subr.mxu0 0.0
  %947 = vmatpush1.msra.mxu0 0.0
  %948 = vmatprep.subr.mxu0 0.0
  %949 = vmatpush1.msra.mxu0 0.0
  %950 = vmatprep.subr.mxu0 0.0
  %951 = vmatpush1.msra.mxu0 0.0
  %952 = vmatprep.subr.mxu0 0.0
  %953 = vmatpush1.msra.mxu0 0.0
  %954 = vmatprep.subr.mxu0 0.0
  %955 = vmatpush1.msra.mxu0 0.0
  %956 = vmatprep.subr.mxu0 0.0
  %957 = vmatpush1.msra.mxu0 0.0
  %958 = vmatprep.subr.mxu0 0.0
  %959 = vmatpush1.msra.mxu0 0.0
  %960 = vmatprep.subr.mxu0 0.0
  %961 = vmatpush1.msra.mxu0 0.0
  %962 = vmatprep.subr.mxu0 0.0
  %963 = vmatpush1.msra.mxu0 0.0
  %964 = vmatprep.subr.mxu0 0.0
  %965 = vmatpush1.msra.mxu0 0.0
  %966 = vmatprep.subr.mxu0 0.0
  %967 = vmatpush1.msra.mxu0 0.0
  %968 = vmatprep.subr.mxu0 0.0
  %969 = vmatpush1.msra.mxu0 %v934
  %970 = vmatprep.subr.mxu0 0.0
  %971 = vmatpush2.msra.mxu0 0.0
  %972 = vmatprep.subr.mxu0 0.0
  %973 = vmatpush2.msra.mxu0 0.0
  %974 = vmatprep.subr.mxu0 0.0
  %975 = vmatpush2.msra.mxu0 0.0
  %976 = vmatprep.subr.mxu0 0.0
  %977 = vmatpush2.msra.mxu0 0.0
  %978 = vmatprep.subr.mxu0 0.0
  %979 = vmatpush2.msra.mxu0 0.0
  %980 = vmatprep.subr.mxu0 0.0
  %981 = vmatpush2.msra.mxu0 0.0
  %982 = vmatprep.subr.mxu0 0.0
  %983 = vmatpush2.msra.mxu0 0.0
  %984 = vmatprep.subr.mxu0 0.0
  %985 = vmatpush2.msra.mxu0 0.0
  %986 = vmatprep.subr.mxu0 0.0
  %987 = vmatpush2.msra.mxu0 0.0
  %988 = vmatprep.subr.mxu0 0.0
  %989 = vmatpush2.msra.mxu0 0.0
  %990 = vmatprep.subr.mxu0 0.0
  %991 = vmatpush2.msra.mxu0 0.0
  %992 = vmatprep.subr.mxu0 0.0
  %993 = vmatpush2.msra.mxu0 0.0
  %994 = vmatprep.subr.mxu0 0.0
  %995 = vmatpush2.msra.mxu0 0.0
  %996 = vmatprep.subr.mxu0 0.0
  %997 = vmatpush2.msra.mxu0 0.0
  %998 = vmatprep.subr.mxu0 0.0
  %999 = vmatpush2.msra.mxu0 0.0
  %1000 = vmatprep.subr.mxu0 0.0
  %1001 = vmatpush2.msra.mxu0 0.0
  %1002 = vmatprep.mubr.f32.mxu0 0.0
  %1003 = vmatmul.mubr.f32.gmra.mxu0 %v936
  %v1004 = vpop.f32.mrf.mxu0
  %v1005 = vadd.f32 0.0, %v1004
  %v1006 = vpop.f32.mrf.mxu0
  %1007 = vdwg.mxu0
  %v1008 = vadd.f32 %v933, %v1005
  %v1009 = vld [vmem:[%s3 + $0x50] sm:$0xff]
  %v1011 = vsel %vm262, %v254, 0
  %1013 = vmatprep.subr.mxu0 0.0
  %1014 = vmatpush1.msra.mxu0 0.0
  %1015 = vmatprep.subr.mxu0 0.0
  %1016 = vmatpush1.msra.mxu0 0.0
  %1017 = vmatprep.subr.mxu0 0.0
  %1018 = vmatpush1.msra.mxu0 0.0
  %1019 = vmatprep.subr.mxu0 0.0
  %1020 = vmatpush1.msra.mxu0 0.0
  %1021 = vmatprep.subr.mxu0 0.0
  %1022 = vmatpush1.msra.mxu0 0.0
  %1023 = vmatprep.subr.mxu0 0.0
  %1024 = vmatpush1.msra.mxu0 0.0
  %1025 = vmatprep.subr.mxu0 0.0
  %1026 = vmatpush1.msra.mxu0 0.0
  %1027 = vmatprep.subr.mxu0 0.0
  %1028 = vmatpush1.msra.mxu0 0.0
  %1029 = vmatprep.subr.mxu0 0.0
  %1030 = vmatpush1.msra.mxu0 0.0
  %1031 = vmatprep.subr.mxu0 0.0
  %1032 = vmatpush1.msra.mxu0 0.0
  %1033 = vmatprep.subr.mxu0 0.0
  %1034 = vmatpush1.msra.mxu0 0.0
  %1035 = vmatprep.subr.mxu0 0.0
  %1036 = vmatpush1.msra.mxu0 0.0
  %1037 = vmatprep.subr.mxu0 0.0
  %1038 = vmatpush1.msra.mxu0 0.0
  %1039 = vmatprep.subr.mxu0 0.0
  %1040 = vmatpush1.msra.mxu0 0.0
  %1041 = vmatprep.subr.mxu0 0.0
  %1042 = vmatpush1.msra.mxu0 0.0
  %1043 = vmatprep.subr.mxu0 0.0
  %1044 = vmatpush1.msra.mxu0 %v1009
  %1045 = vmatprep.subr.mxu0 0.0
  %1046 = vmatpush2.msra.mxu0 0.0
  %1047 = vmatprep.subr.mxu0 0.0
  %1048 = vmatpush2.msra.mxu0 0.0
  %1049 = vmatprep.subr.mxu0 0.0
  %1050 = vmatpush2.msra.mxu0 0.0
  %1051 = vmatprep.subr.mxu0 0.0
  %1052 = vmatpush2.msra.mxu0 0.0
  %1053 = vmatprep.subr.mxu0 0.0
  %1054 = vmatpush2.msra.mxu0 0.0
  %1055 = vmatprep.subr.mxu0 0.0
  %1056 = vmatpush2.msra.mxu0 0.0
  %1057 = vmatprep.subr.mxu0 0.0
  %1058 = vmatpush2.msra.mxu0 0.0
  %1059 = vmatprep.subr.mxu0 0.0
  %1060 = vmatpush2.msra.mxu0 0.0
  %1061 = vmatprep.subr.mxu0 0.0
  %1062 = vmatpush2.msra.mxu0 0.0
  %1063 = vmatprep.subr.mxu0 0.0
  %1064 = vmatpush2.msra.mxu0 0.0
  %1065 = vmatprep.subr.mxu0 0.0
  %1066 = vmatpush2.msra.mxu0 0.0
  %1067 = vmatprep.subr.mxu0 0.0
  %1068 = vmatpush2.msra.mxu0 0.0
  %1069 = vmatprep.subr.mxu0 0.0
  %1070 = vmatpush2.msra.mxu0 0.0
  %1071 = vmatprep.subr.mxu0 0.0
  %1072 = vmatpush2.msra.mxu0 0.0
  %1073 = vmatprep.subr.mxu0 0.0
  %1074 = vmatpush2.msra.mxu0 0.0
  %1075 = vmatprep.subr.mxu0 0.0
  %1076 = vmatpush2.msra.mxu0 0.0
  %1077 = vmatprep.mubr.f32.mxu0 0.0
  %1078 = vmatmul.mubr.f32.gmra.mxu0 %v1011
  %v1079 = vpop.f32.mrf.mxu0
  %v1080 = vadd.f32 0.0, %v1079
  %v1081 = vpop.f32.mrf.mxu0
  %1082 = vdwg.mxu0
  %v1083 = vadd.f32 %v1008, %v1080
  %v1084 = vld [vmem:[%s3 + $0x58] sm:$0xff]
  %v1086 = vsel %vm262, %v255, 0
  %1088 = vmatprep.subr.mxu0 0.0
  %1089 = vmatpush1.msra.mxu0 0.0
  %1090 = vmatprep.subr.mxu0 0.0
  %1091 = vmatpush1.msra.mxu0 0.0
  %1092 = vmatprep.subr.mxu0 0.0
  %1093 = vmatpush1.msra.mxu0 0.0
  %1094 = vmatprep.subr.mxu0 0.0
  %1095 = vmatpush1.msra.mxu0 0.0
  %1096 = vmatprep.subr.mxu0 0.0
  %1097 = vmatpush1.msra.mxu0 0.0
  %1098 = vmatprep.subr.mxu0 0.0
  %1099 = vmatpush1.msra.mxu0 0.0
  %1100 = vmatprep.subr.mxu0 0.0
  %1101 = vmatpush1.msra.mxu0 0.0
  %1102 = vmatprep.subr.mxu0 0.0
  %1103 = vmatpush1.msra.mxu0 0.0
  %1104 = vmatprep.subr.mxu0 0.0
  %1105 = vmatpush1.msra.mxu0 0.0
  %1106 = vmatprep.subr.mxu0 0.0
  %1107 = vmatpush1.msra.mxu0 0.0
  %1108 = vmatprep.subr.mxu0 0.0
  %1109 = vmatpush1.msra.mxu0 0.0
  %1110 = vmatprep.subr.mxu0 0.0
  %1111 = vmatpush1.msra.mxu0 0.0
  %1112 = vmatprep.subr.mxu0 0.0
  %1113 = vmatpush1.msra.mxu0 0.0
  %1114 = vmatprep.subr.mxu0 0.0
  %1115 = vmatpush1.msra.mxu0 0.0
  %1116 = vmatprep.subr.mxu0 0.0
  %1117 = vmatpush1.msra.mxu0 0.0
  %1118 = vmatprep.subr.mxu0 0.0
  %1119 = vmatpush1.msra.mxu0 %v1084
  %1120 = vmatprep.subr.mxu0 0.0
  %1121 = vmatpush2.msra.mxu0 0.0
  %1122 = vmatprep.subr.mxu0 0.0
  %1123 = vmatpush2.msra.mxu0 0.0
  %1124 = vmatprep.subr.mxu0 0.0
  %1125 = vmatpush2.msra.mxu0 0.0
  %1126 = vmatprep.subr.mxu0 0.0
  %1127 = vmatpush2.msra.mxu0 0.0
  %1128 = vmatprep.subr.mxu0 0.0
  %1129 = vmatpush2.msra.mxu0 0.0
  %1130 = vmatprep.subr.mxu0 0.0
  %1131 = vmatpush2.msra.mxu0 0.0
  %1132 = vmatprep.subr.mxu0 0.0
  %1133 = vmatpush2.msra.mxu0 0.0
  %1134 = vmatprep.subr.mxu0 0.0
  %1135 = vmatpush2.msra.mxu0 0.0
  %1136 = vmatprep.subr.mxu0 0.0
  %1137 = vmatpush2.msra.mxu0 0.0
  %1138 = vmatprep.subr.mxu0 0.0
  %1139 = vmatpush2.msra.mxu0 0.0
  %1140 = vmatprep.subr.mxu0 0.0
  %1141 = vmatpush2.msra.mxu0 0.0
  %1142 = vmatprep.subr.mxu0 0.0
  %1143 = vmatpush2.msra.mxu0 0.0
  %1144 = vmatprep.subr.mxu0 0.0
  %1145 = vmatpush2.msra.mxu0 0.0
  %1146 = vmatprep.subr.mxu0 0.0
  %1147 = vmatpush2.msra.mxu0 0.0
  %1148 = vmatprep.subr.mxu0 0.0
  %1149 = vmatpush2.msra.mxu0 0.0
  %1150 = vmatprep.subr.mxu0 0.0
  %1151 = vmatpush2.msra.mxu0 0.0
  %1152 = vmatprep.mubr.f32.mxu0 0.0
  %1153 = vmatmul.mubr.f32.gmra.mxu0 %v1086
  %v1154 = vpop.f32.mrf.mxu0
  %v1155 = vadd.f32 0.0, %v1154
  %v1156 = vpop.f32.mrf.mxu0
  %1157 = vdwg.mxu0
  %v1158 = vadd.f32 %v1083, %v1155
  %v1159 = vld [vmem:[%s3 + $0x60] sm:$0xff]
  %v1161 = vsel %vm262, %v256, 0
  %1163 = vmatprep.subr.mxu0 0.0
  %1164 = vmatpush1.msra.mxu0 0.0
  %1165 = vmatprep.subr.mxu0 0.0
  %1166 = vmatpush1.msra.mxu0 0.0
  %1167 = vmatprep.subr.mxu0 0.0
  %1168 = vmatpush1.msra.mxu0 0.0
  %1169 = vmatprep.subr.mxu0 0.0
  %1170 = vmatpush1.msra.mxu0 0.0
  %1171 = vmatprep.subr.mxu0 0.0
  %1172 = vmatpush1.msra.mxu0 0.0
  %1173 = vmatprep.subr.mxu0 0.0
  %1174 = vmatpush1.msra.mxu0 0.0
  %1175 = vmatprep.subr.mxu0 0.0
  %1176 = vmatpush1.msra.mxu0 0.0
  %1177 = vmatprep.subr.mxu0 0.0
  %1178 = vmatpush1.msra.mxu0 0.0
  %1179 = vmatprep.subr.mxu0 0.0
  %1180 = vmatpush1.msra.mxu0 0.0
  %1181 = vmatprep.subr.mxu0 0.0
  %1182 = vmatpush1.msra.mxu0 0.0
  %1183 = vmatprep.subr.mxu0 0.0
  %1184 = vmatpush1.msra.mxu0 0.0
  %1185 = vmatprep.subr.mxu0 0.0
  %1186 = vmatpush1.msra.mxu0 0.0
  %1187 = vmatprep.subr.mxu0 0.0
  %1188 = vmatpush1.msra.mxu0 0.0
  %1189 = vmatprep.subr.mxu0 0.0
  %1190 = vmatpush1.msra.mxu0 0.0
  %1191 = vmatprep.subr.mxu0 0.0
  %1192 = vmatpush1.msra.mxu0 0.0
  %1193 = vmatprep.subr.mxu0 0.0
  %1194 = vmatpush1.msra.mxu0 %v1159
  %1195 = vmatprep.subr.mxu0 0.0
  %1196 = vmatpush2.msra.mxu0 0.0
  %1197 = vmatprep.subr.mxu0 0.0
  %1198 = vmatpush2.msra.mxu0 0.0
  %1199 = vmatprep.subr.mxu0 0.0
  %1200 = vmatpush2.msra.mxu0 0.0
  %1201 = vmatprep.subr.mxu0 0.0
  %1202 = vmatpush2.msra.mxu0 0.0
  %1203 = vmatprep.subr.mxu0 0.0
  %1204 = vmatpush2.msra.mxu0 0.0
  %1205 = vmatprep.subr.mxu0 0.0
  %1206 = vmatpush2.msra.mxu0 0.0
  %1207 = vmatprep.subr.mxu0 0.0
  %1208 = vmatpush2.msra.mxu0 0.0
  %1209 = vmatprep.subr.mxu0 0.0
  %1210 = vmatpush2.msra.mxu0 0.0
  %1211 = vmatprep.subr.mxu0 0.0
  %1212 = vmatpush2.msra.mxu0 0.0
  %1213 = vmatprep.subr.mxu0 0.0
  %1214 = vmatpush2.msra.mxu0 0.0
  %1215 = vmatprep.subr.mxu0 0.0
  %1216 = vmatpush2.msra.mxu0 0.0
  %1217 = vmatprep.subr.mxu0 0.0
  %1218 = vmatpush2.msra.mxu0 0.0
  %1219 = vmatprep.subr.mxu0 0.0
  %1220 = vmatpush2.msra.mxu0 0.0
  %1221 = vmatprep.subr.mxu0 0.0
  %1222 = vmatpush2.msra.mxu0 0.0
  %1223 = vmatprep.subr.mxu0 0.0
  %1224 = vmatpush2.msra.mxu0 0.0
  %1225 = vmatprep.subr.mxu0 0.0
  %1226 = vmatpush2.msra.mxu0 0.0
  %1227 = vmatprep.mubr.f32.mxu0 0.0
  %1228 = vmatmul.mubr.f32.gmra.mxu0 %v1161
  %v1229 = vpop.f32.mrf.mxu0
  %v1230 = vadd.f32 0.0, %v1229
  %v1231 = vpop.f32.mrf.mxu0
  %1232 = vdwg.mxu0
  %v1233 = vadd.f32 %v1158, %v1230
  %v1234 = vld [vmem:[%s3 + $0x68] sm:$0xff]
  %v1236 = vsel %vm262, %v257, 0
  %1238 = vmatprep.subr.mxu0 0.0
  %1239 = vmatpush1.msra.mxu0 0.0
  %1240 = vmatprep.subr.mxu0 0.0
  %1241 = vmatpush1.msra.mxu0 0.0
  %1242 = vmatprep.subr.mxu0 0.0
  %1243 = vmatpush1.msra.mxu0 0.0
  %1244 = vmatprep.subr.mxu0 0.0
  %1245 = vmatpush1.msra.mxu0 0.0
  %1246 = vmatprep.subr.mxu0 0.0
  %1247 = vmatpush1.msra.mxu0 0.0
  %1248 = vmatprep.subr.mxu0 0.0
  %1249 = vmatpush1.msra.mxu0 0.0
  %1250 = vmatprep.subr.mxu0 0.0
  %1251 = vmatpush1.msra.mxu0 0.0
  %1252 = vmatprep.subr.mxu0 0.0
  %1253 = vmatpush1.msra.mxu0 0.0
  %1254 = vmatprep.subr.mxu0 0.0
  %1255 = vmatpush1.msra.mxu0 0.0
  %1256 = vmatprep.subr.mxu0 0.0
  %1257 = vmatpush1.msra.mxu0 0.0
  %1258 = vmatprep.subr.mxu0 0.0
  %1259 = vmatpush1.msra.mxu0 0.0
  %1260 = vmatprep.subr.mxu0 0.0
  %1261 = vmatpush1.msra.mxu0 0.0
  %1262 = vmatprep.subr.mxu0 0.0
  %1263 = vmatpush1.msra.mxu0 0.0
  %1264 = vmatprep.subr.mxu0 0.0
  %1265 = vmatpush1.msra.mxu0 0.0
  %1266 = vmatprep.subr.mxu0 0.0
  %1267 = vmatpush1.msra.mxu0 0.0
  %1268 = vmatprep.subr.mxu0 0.0
  %1269 = vmatpush1.msra.mxu0 %v1234
  %1270 = vmatprep.subr.mxu0 0.0
  %1271 = vmatpush2.msra.mxu0 0.0
  %1272 = vmatprep.subr.mxu0 0.0
  %1273 = vmatpush2.msra.mxu0 0.0
  %1274 = vmatprep.subr.mxu0 0.0
  %1275 = vmatpush2.msra.mxu0 0.0
  %1276 = vmatprep.subr.mxu0 0.0
  %1277 = vmatpush2.msra.mxu0 0.0
  %1278 = vmatprep.subr.mxu0 0.0
  %1279 = vmatpush2.msra.mxu0 0.0
  %1280 = vmatprep.subr.mxu0 0.0
  %1281 = vmatpush2.msra.mxu0 0.0
  %1282 = vmatprep.subr.mxu0 0.0
  %1283 = vmatpush2.msra.mxu0 0.0
  %1284 = vmatprep.subr.mxu0 0.0
  %1285 = vmatpush2.msra.mxu0 0.0
  %1286 = vmatprep.subr.mxu0 0.0
  %1287 = vmatpush2.msra.mxu0 0.0
  %1288 = vmatprep.subr.mxu0 0.0
  %1289 = vmatpush2.msra.mxu0 0.0
  %1290 = vmatprep.subr.mxu0 0.0
  %1291 = vmatpush2.msra.mxu0 0.0
  %1292 = vmatprep.subr.mxu0 0.0
  %1293 = vmatpush2.msra.mxu0 0.0
  %1294 = vmatprep.subr.mxu0 0.0
  %1295 = vmatpush2.msra.mxu0 0.0
  %1296 = vmatprep.subr.mxu0 0.0
  %1297 = vmatpush2.msra.mxu0 0.0
  %1298 = vmatprep.subr.mxu0 0.0
  %1299 = vmatpush2.msra.mxu0 0.0
  %1300 = vmatprep.subr.mxu0 0.0
  %1301 = vmatpush2.msra.mxu0 0.0
  %1302 = vmatprep.mubr.f32.mxu0 0.0
  %1303 = vmatmul.mubr.f32.gmra.mxu0 %v1236
  %v1304 = vpop.f32.mrf.mxu0
  %v1305 = vadd.f32 0.0, %v1304
  %v1306 = vpop.f32.mrf.mxu0
  %1307 = vdwg.mxu0
  %v1308 = vadd.f32 %v1233, %v1305
  %v1309 = vld [vmem:[%s3 + $0x70] sm:$0xff]
  %v1311 = vsel %vm262, %v258, 0
  %1313 = vmatprep.subr.mxu0 0.0
  %1314 = vmatpush1.msra.mxu0 0.0
  %1315 = vmatprep.subr.mxu0 0.0
  %1316 = vmatpush1.msra.mxu0 0.0
  %1317 = vmatprep.subr.mxu0 0.0
  %1318 = vmatpush1.msra.mxu0 0.0
  %1319 = vmatprep.subr.mxu0 0.0
  %1320 = vmatpush1.msra.mxu0 0.0
  %1321 = vmatprep.subr.mxu0 0.0
  %1322 = vmatpush1.msra.mxu0 0.0
  %1323 = vmatprep.subr.mxu0 0.0
  %1324 = vmatpush1.msra.mxu0 0.0
  %1325 = vmatprep.subr.mxu0 0.0
  %1326 = vmatpush1.msra.mxu0 0.0
  %1327 = vmatprep.subr.mxu0 0.0
  %1328 = vmatpush1.msra.mxu0 0.0
  %1329 = vmatprep.subr.mxu0 0.0
  %1330 = vmatpush1.msra.mxu0 0.0
  %1331 = vmatprep.subr.mxu0 0.0
  %1332 = vmatpush1.msra.mxu0 0.0
  %1333 = vmatprep.subr.mxu0 0.0
  %1334 = vmatpush1.msra.mxu0 0.0
  %1335 = vmatprep.subr.mxu0 0.0
  %1336 = vmatpush1.msra.mxu0 0.0
  %1337 = vmatprep.subr.mxu0 0.0
  %1338 = vmatpush1.msra.mxu0 0.0
  %1339 = vmatprep.subr.mxu0 0.0
  %1340 = vmatpush1.msra.mxu0 0.0
  %1341 = vmatprep.subr.mxu0 0.0
  %1342 = vmatpush1.msra.mxu0 0.0
  %1343 = vmatprep.subr.mxu0 0.0
  %1344 = vmatpush1.msra.mxu0 %v1309
  %1345 = vmatprep.subr.mxu0 0.0
  %1346 = vmatpush2.msra.mxu0 0.0
  %1347 = vmatprep.subr.mxu0 0.0
  %1348 = vmatpush2.msra.mxu0 0.0
  %1349 = vmatprep.subr.mxu0 0.0
  %1350 = vmatpush2.msra.mxu0 0.0
  %1351 = vmatprep.subr.mxu0 0.0
  %1352 = vmatpush2.msra.mxu0 0.0
  %1353 = vmatprep.subr.mxu0 0.0
  %1354 = vmatpush2.msra.mxu0 0.0
  %1355 = vmatprep.subr.mxu0 0.0
  %1356 = vmatpush2.msra.mxu0 0.0
  %1357 = vmatprep.subr.mxu0 0.0
  %1358 = vmatpush2.msra.mxu0 0.0
  %1359 = vmatprep.subr.mxu0 0.0
  %1360 = vmatpush2.msra.mxu0 0.0
  %1361 = vmatprep.subr.mxu0 0.0
  %1362 = vmatpush2.msra.mxu0 0.0
  %1363 = vmatprep.subr.mxu0 0.0
  %1364 = vmatpush2.msra.mxu0 0.0
  %1365 = vmatprep.subr.mxu0 0.0
  %1366 = vmatpush2.msra.mxu0 0.0
  %1367 = vmatprep.subr.mxu0 0.0
  %1368 = vmatpush2.msra.mxu0 0.0
  %1369 = vmatprep.subr.mxu0 0.0
  %1370 = vmatpush2.msra.mxu0 0.0
  %1371 = vmatprep.subr.mxu0 0.0
  %1372 = vmatpush2.msra.mxu0 0.0
  %1373 = vmatprep.subr.mxu0 0.0
  %1374 = vmatpush2.msra.mxu0 0.0
  %1375 = vmatprep.subr.mxu0 0.0
  %1376 = vmatpush2.msra.mxu0 0.0
  %1377 = vmatprep.mubr.f32.mxu0 0.0
  %1378 = vmatmul.mubr.f32.gmra.mxu0 %v1311
  %v1379 = vpop.f32.mrf.mxu0
  %v1380 = vadd.f32 0.0, %v1379
  %v1381 = vpop.f32.mrf.mxu0
  %1382 = vdwg.mxu0
  %v1383 = vadd.f32 %v1308, %v1380
  %v1384 = vld [vmem:[%s3 + $0x78] sm:$0xff]
  %v1386 = vsel %vm262, %v259, 0
  %1388 = vmatprep.subr.mxu0 0.0
  %1389 = vmatpush1.msra.mxu0 0.0
  %1390 = vmatprep.subr.mxu0 0.0
  %1391 = vmatpush1.msra.mxu0 0.0
  %1392 = vmatprep.subr.mxu0 0.0
  %1393 = vmatpush1.msra.mxu0 0.0
  %1394 = vmatprep.subr.mxu0 0.0
  %1395 = vmatpush1.msra.mxu0 0.0
  %1396 = vmatprep.subr.mxu0 0.0
  %1397 = vmatpush1.msra.mxu0 0.0
  %1398 = vmatprep.subr.mxu0 0.0
  %1399 = vmatpush1.msra.mxu0 0.0
  %1400 = vmatprep.subr.mxu0 0.0
  %1401 = vmatpush1.msra.mxu0 0.0
  %1402 = vmatprep.subr.mxu0 0.0
  %1403 = vmatpush1.msra.mxu0 0.0
  %1404 = vmatprep.subr.mxu0 0.0
  %1405 = vmatpush1.msra.mxu0 0.0
  %1406 = vmatprep.subr.mxu0 0.0
  %1407 = vmatpush1.msra.mxu0 0.0
  %1408 = vmatprep.subr.mxu0 0.0
  %1409 = vmatpush1.msra.mxu0 0.0
  %1410 = vmatprep.subr.mxu0 0.0
  %1411 = vmatpush1.msra.mxu0 0.0
  %1412 = vmatprep.subr.mxu0 0.0
  %1413 = vmatpush1.msra.mxu0 0.0
  %1414 = vmatprep.subr.mxu0 0.0
  %1415 = vmatpush1.msra.mxu0 0.0
  %1416 = vmatprep.subr.mxu0 0.0
  %1417 = vmatpush1.msra.mxu0 0.0
  %1418 = vmatprep.subr.mxu0 0.0
  %1419 = vmatpush1.msra.mxu0 %v1384
  %1420 = vmatprep.subr.mxu0 0.0
  %1421 = vmatpush2.msra.mxu0 0.0
  %1422 = vmatprep.subr.mxu0 0.0
  %1423 = vmatpush2.msra.mxu0 0.0
  %1424 = vmatprep.subr.mxu0 0.0
  %1425 = vmatpush2.msra.mxu0 0.0
  %1426 = vmatprep.subr.mxu0 0.0
  %1427 = vmatpush2.msra.mxu0 0.0
  %1428 = vmatprep.subr.mxu0 0.0
  %1429 = vmatpush2.msra.mxu0 0.0
  %1430 = vmatprep.subr.mxu0 0.0
  %1431 = vmatpush2.msra.mxu0 0.0
  %1432 = vmatprep.subr.mxu0 0.0
  %1433 = vmatpush2.msra.mxu0 0.0
  %1434 = vmatprep.subr.mxu0 0.0
  %1435 = vmatpush2.msra.mxu0 0.0
  %1436 = vmatprep.subr.mxu0 0.0
  %1437 = vmatpush2.msra.mxu0 0.0
  %1438 = vmatprep.subr.mxu0 0.0
  %1439 = vmatpush2.msra.mxu0 0.0
  %1440 = vmatprep.subr.mxu0 0.0
  %1441 = vmatpush2.msra.mxu0 0.0
  %1442 = vmatprep.subr.mxu0 0.0
  %1443 = vmatpush2.msra.mxu0 0.0
  %1444 = vmatprep.subr.mxu0 0.0
  %1445 = vmatpush2.msra.mxu0 0.0
  %1446 = vmatprep.subr.mxu0 0.0
  %1447 = vmatpush2.msra.mxu0 0.0
  %1448 = vmatprep.subr.mxu0 0.0
  %1449 = vmatpush2.msra.mxu0 0.0
  %1450 = vmatprep.subr.mxu0 0.0
  %1451 = vmatpush2.msra.mxu0 0.0
  %1452 = vmatprep.mubr.f32.mxu0 0.0
  %1453 = vmatmul.mubr.f32.gmra.mxu0 %v1386
  %v1454 = vpop.f32.mrf.mxu0
  %v1455 = vadd.f32 0.0, %v1454
  %v1456 = vpop.f32.mrf.mxu0
  %1457 = vdwg.mxu0
  %v1458 = vadd.f32 %v1383, %v1455
  %v1459 = vld [vmem:[%s4] sm:$0x1]
  %v1461 = vlaneseq
  %v1462 = vshrl.u32 %v1461, 7
  %v1463 = vsub.s32 0, %v1462
  %v1464 = vrot.slane %v1459, %v1463
  %v1466 = vadd.f32 %v1458, %v1464
  %vm1467 = vcmp.ge.f32.partialorder %v1466, 0.0
  %v1468 = vmul.f32 %v1466, 0.01
  %v1469 = vsel %vm1467, %v1466, %v1468
  %v1470 = vld [vmem:[%s5] sm:$0x1]
  %v1472 = vlaneseq
  %v1473 = vshrl.u32 %v1472, 7
  %v1474 = vsub.s32 0, %v1473
  %v1475 = vrot.slane %v1470, %v1474
  %v1477 = vmul.f32 %v1469, %v1475
  %v1478 = vsel %vm262, %v1477, 0.0
  %1479 = vadd.xlane.f32.xlu0 %v1478
  %v1480 = vpop.xlane.xlu0 %1479
  %v1481 = vld [vmem:[#allocation2] sm:$0x1]
  %v1483 = vlaneseq
  %v1484 = vshrl.u32 %v1483, 7
  %v1485 = vsub.s32 0, %v1484
  %v1486 = vrot.slane %v1481, %v1485
  %v1488 = vadd.f32 %v1480, %v1486
  %vm1489 = vcmask 7168
  %1490 = vst.msk [vmem:[%s7] sm:$0xff] %vm1489, %v1488
  // Predicated region
  $region30: #{tpu_custom_call.1} parent=0 // pred_check
    _
  $region31: #{tpu_custom_call.1} parent=0 // pred_check_branch
    %1492 = sbr.rel (0) target = $region33
  $region32: #{tpu_custom_call.1} parent=0 // pred_region
    _
  $region33: #{tpu_custom_call.1} parent=0 // pred_fallthru
    _
  // Predicated region
  $region34: #{tpu_custom_call.1} parent=0 // pred_check
    _
  $region35: #{tpu_custom_call.1} parent=0 // pred_check_branch
    %1494 = sbr.rel (0) target = $region37
  $region36: #{tpu_custom_call.1} parent=0 // pred_region
    _
  $region37: #{tpu_custom_call.1} parent=0 // pred_fallthru
    _

</llo_original>
